<compile_context>
chip_gen: v5e
topology: v5e:2x2
jax: 0.10.0
libtpu: 0.0.40
codegen_flags: <defaults>
</compile_context>

<pallas_src>
import math
import functools

import jax
import jax.numpy as jnp
from jax import lax
from jax.experimental import pallas as pl
from jax.experimental.pallas import tpu as pltpu


# ----------------------------------------------------------------------------
# Shared helpers
# ----------------------------------------------------------------------------
def _layer_norm_f32(x, gamma, beta, eps=1e-5):
    # x: (T, D) f32; gamma/beta: (1, D) f32   (matches nn.LayerNorm, eps=1e-5)
    mu = jnp.mean(x, axis=-1, keepdims=True)
    var = jnp.mean((x - mu) * (x - mu), axis=-1, keepdims=True)
    return (x - mu) * lax.rsqrt(var + eps) * gamma + beta


def _vmem_cap_bytes():
    try:
        return int(pltpu.get_tpu_info().vmem_capacity_bytes)
    except Exception:
        return 64 * 2**20          # conservative fallback (v7x per-TC size)


def _vmem_limit(need_bytes):
    cap = int(_vmem_cap_bytes() * 0.85)          # headroom for compiler scratch
    return max(32 * 2**20, min(cap, int(need_bytes * 2)))


def _head_group(num_heads, head_dim, d_model):
    # Pack G heads per grid step so the packed lane width G*head_dim is >= 128
    # (or the full model dim) -- avoids sub-128 masked vregs in the projections.
    target = max(1, 128 // head_dim)
    g = 1
    for cand in range(1, num_heads + 1):
        if num_heads % cand == 0 and cand <= target:
            g = cand
    if (g * head_dim) % 128 != 0 and (g * head_dim) != d_model:
        g = num_heads                            # one group == full D lane width
    return g


def _pick_tile(n, candidates):
    for c in candidates:
        if n % c == 0:
            return c
    return n   # TODO(synk): pad ragged sizes to a multiple of 128 instead


def _attn_vmem_bytes(tq, s, d, ghd, g):
    bf, f4 = 2, 4
    blocks = 2 * (s * d * bf + d * 3 * ghd * bf + 3 * ghd * f4 + tq * ghd * bf)
    scratch = 2 * s * ghd * bf
    temps = 3 * g * tq * s * f4 + 2 * s * ghd * f4 + 6 * tq * ghd * f4
    return blocks + scratch + temps


def _ffn_vmem_bytes(t, d, fc):
    bf, f4 = 2, 4
    blocks = 2 * (3 * t * d * bf + d * d * bf + 2 * d * fc * bf) \
        + 16 * d * f4 + 4 * fc * f4
    scratch = t * d * (bf + f4)
    temps = t * fc * (f4 + bf) + 6 * t * d * f4
    return blocks + scratch + temps


def _q_tile(s, d, ghd, g):
    budget = int(_vmem_cap_bytes() * 0.7)
    for t in (512, 256, 128):
        if s % t == 0 and _attn_vmem_bytes(t, s, d, ghd, g) <= budget:
            return t
    for t in (128, 256, 512):
        if s % t == 0:
            return t
    return s


def _ffn_tiles(tokens, d, d_ff):
    budget = int(_vmem_cap_bytes() * 0.7)
    for t in (1024, 512, 256, 128):
        for fc in (512, 256, 128):
            if tokens % t == 0 and d_ff % fc == 0 \
                    and _ffn_vmem_bytes(t, d, fc) <= budget:
                return t, fc
    return _pick_tile(tokens, (256, 128)), _pick_tile(d_ff, (256, 128))


# ----------------------------------------------------------------------------
# Kernel 1: grouped-head attention core.
#   grid = (B, num_head_groups, num_query_tiles)
#   K/V projected once per (batch, head_group) into VMEM scratch, reused by
#   every query tile; output is the per-group context slab (bf16), columns
#   [hg*ghd : (hg+1)*ghd] of the (B, S, D) context tensor.
# ----------------------------------------------------------------------------
def attn_core_kernel(xf_ref, wqkv_ref, bqkv_ref, ctx_ref, k_cache, v_cache,
                     *, tq, ghd, heads, head_dim, scale):
    qi = pl.program_id(2)
    s_len = k_cache.shape[0]

    # --- project K/V for the whole sequence once per (batch, head-group) ----
    @pl.when(qi == 0)
    def _():
        xf = xf_ref[0]                                          # (S, D) bf16
        w_kv = wqkv_ref[0, :, pl.ds(ghd, 2 * ghd)]              # (D, 2*ghd) bf16
        b_kv = bqkv_ref[0, :, pl.ds(ghd, 2 * ghd)]              # (1, 2*ghd) f32
        kv = jnp.dot(xf, w_kv, preferred_element_type=jnp.float32) + b_kv
        k_cache[...] = kv[:, :ghd].astype(k_cache.dtype)
        v_cache[...] = kv[:, ghd:].astype(v_cache.dtype)

    # --- per-tile Q projection (each row projected exactly once) ------------
    start = pl.multiple_of(qi * tq, tq)
    x_q = xf_ref[0, pl.ds(start, tq), :]                        # (tq, D) bf16
    w_q = wqkv_ref[0, :, pl.ds(0, ghd)]
    b_q = bqkv_ref[0, :, pl.ds(0, ghd)]
    q = jnp.dot(x_q, w_q, preferred_element_type=jnp.float32) + b_q
    q = (q * scale).astype(jnp.bfloat16)        # fold 1/sqrt(head_dim) into q

    # --- per-head softmax attention via grouped einsum -----------------------
    qh = q.reshape(tq, heads, head_dim)
    kh = k_cache[...].reshape(s_len, heads, head_dim)
    vh = v_cache[...].reshape(s_len, heads, head_dim)

    sc = jnp.einsum("qhd,khd->hqk", qh, kh,
                    preferred_element_type=jnp.float32)          # (G, tq, S)
    m = jnp.max(sc, axis=-1, keepdims=True)
    e = jnp.exp(sc - m)
    p = e * pl.reciprocal(jnp.sum(e, axis=-1, keepdims=True), approx=True)
    ctx = jnp.einsum("hqk,khd->qhd", p.astype(jnp.bfloat16), vh,
                     preferred_element_type=jnp.float32)         # (tq, G, hd)
    ctx_ref[0] = ctx.reshape(tq, ghd).astype(ctx_ref.dtype)


def attention_core(x, wqkv, bqkv, *, num_heads, head_dim, group):
    B, S, D = x.shape
    ghd = group * head_dim
    hg = num_heads // group
    tq = _q_tile(S, D, ghd, group)
    nq = S // tq
    scale = 1.0 / math.sqrt(head_dim)

    kernel = functools.partial(attn_core_kernel, tq=tq, ghd=ghd, heads=group,
                               head_dim=head_dim, scale=scale)

    return pl.pallas_call(
        kernel,
        out_shape=jax.ShapeDtypeStruct((B, S, D), jnp.bfloat16),
        grid_spec=pltpu.PrefetchScalarGridSpec(
            num_scalar_prefetch=0,
            grid=(B, hg, nq),
            in_specs=[
                # full-sequence activations (bf16); block index changes only with b
                pl.BlockSpec((1, S, D), lambda b, g, qi: (b, 0, 0)),
                # fused [Wq|Wk|Wv] per head-group
                pl.BlockSpec((1, D, 3 * ghd), lambda b, g, qi: (g, 0, 0)),
                pl.BlockSpec((1, 1, 3 * ghd), lambda b, g, qi: (g, 0, 0)),
            ],
            out_specs=pl.BlockSpec((1, tq, ghd), lambda b, g, qi: (b, qi, g)),
            scratch_shapes=[pltpu.VMEM((S, ghd), jnp.bfloat16),   # K cache
                            pltpu.VMEM((S, ghd), jnp.bfloat16)],  # V cache
        ),
        compiler_params=pltpu.CompilerParams(
            dimension_semantics=("parallel", "parallel", "arbitrary"),
            vmem_limit_bytes=_vmem_limit(_attn_vmem_bytes(tq, S, D, ghd, group))),
    )(x, wqkv, bqkv)


# ----------------------------------------------------------------------------
# Kernel 2: Wo projection + residual + LN1 fused into the FFN, + residual + LN2.
#   grid = (num_token_tiles, num_dff_chunks)   -- tokens = B*S flattened
# ----------------------------------------------------------------------------
def ffn_ln_kernel(ctx_ref, x_ref, wo_ref, bo_ref, g1_ref, be1_ref,
                  w1_ref, b1_ref, w2_ref, b2_ref, g2_ref, be2_ref,
                  o_ref, x1_ref, acc_ref):
    f = pl.program_id(1)

    # Attention epilogue (once per token tile): Wo proj + residual + LayerNorm1.
    @pl.when(f == 0)
    def _():
        attn = jnp.dot(ctx_ref[...], wo_ref[...],
                       preferred_element_type=jnp.float32) + bo_ref[...]
        y = x_ref[...].astype(jnp.float32) + attn
        x1_ref[...] = _layer_norm_f32(y, g1_ref[...], be1_ref[...]
                                      ).astype(x1_ref.dtype)
        acc_ref[...] = jnp.zeros_like(acc_ref)

    # FFN chunk: relu(x1 @ W1_f + b1_f) @ W2_f accumulated in f32.
    h = jnp.dot(x1_ref[...], w1_ref[...],
                preferred_element_type=jnp.float32) + b1_ref[...]
    h = jnp.maximum(h, 0.0)
    acc_ref[...] += jnp.dot(h.astype(jnp.bfloat16), w2_ref[...],
                            preferred_element_type=jnp.float32)

    @pl.when(f == pl.num_programs(1) - 1)
    def _():
        y2 = x1_ref[...].astype(jnp.float32) + acc_ref[...] + b2_ref[...]
        o_ref[...] = _layer_norm_f32(y2, g2_ref[...], be2_ref[...]
                                     ).astype(o_ref.dtype)


def ffn_ln_block(ctx, x, p):
    B, S, D = x.shape
    tokens = B * S
    d_ff = p["w1"].shape[1]
    t, fc = _ffn_tiles(tokens, D, d_ff)
    nt, nf = tokens // t, d_ff // fc

    ctx2 = ctx.reshape(tokens, D)
    x2 = x.reshape(tokens, D)

    out = pl.pallas_call(
        ffn_ln_kernel,
        out_shape=jax.ShapeDtypeStruct((tokens, D), jnp.bfloat16),
        grid_spec=pltpu.PrefetchScalarGridSpec(
            num_scalar_prefetch=0,
            grid=(nt, nf),
            in_specs=[
                pl.BlockSpec((t, D), lambda i, f: (i, 0)),    # attention context
                pl.BlockSpec((t, D), lambda i, f: (i, 0)),    # layer input (residual)
                pl.BlockSpec((D, D), lambda i, f: (0, 0)),    # Wo (resident)
                pl.BlockSpec((1, D), lambda i, f: (0, 0)),    # bo
                pl.BlockSpec((1, D), lambda i, f: (0, 0)),    # gamma1
                pl.BlockSpec((1, D), lambda i, f: (0, 0)),    # beta1
                pl.BlockSpec((D, fc), lambda i, f: (0, f)),   # W1 chunk
                pl.BlockSpec((1, fc), lambda i, f: (0, f)),   # b1 chunk
                pl.BlockSpec((fc, D), lambda i, f: (f, 0)),   # W2 chunk
                pl.BlockSpec((1, D), lambda i, f: (0, 0)),    # b2
                pl.BlockSpec((1, D), lambda i, f: (0, 0)),    # gamma2
                pl.BlockSpec((1, D), lambda i, f: (0, 0)),    # beta2
            ],
            out_specs=pl.BlockSpec((t, D), lambda i, f: (i, 0)),
            scratch_shapes=[pltpu.VMEM((t, D), jnp.bfloat16),   # x1 (post-LN1)
                            pltpu.VMEM((t, D), jnp.float32)],   # FFN accumulator
        ),
        compiler_params=pltpu.CompilerParams(
            dimension_semantics=("parallel", "arbitrary"),
            vmem_limit_bytes=_vmem_limit(_ffn_vmem_bytes(t, D, fc))),
        input_output_aliases={0: 0},   # write over the dead context buffer
    )(ctx2, x2, p["wo"], p["bo"], p["g1"], p["be1"],
      p["w1"], p["b1"], p["w2"], p["b2"], p["g2"], p["be2"])
    return out.reshape(B, S, D)


# ----------------------------------------------------------------------------
# Full encoder
# ----------------------------------------------------------------------------
def transformer_encoder(x, layer_params, *, num_heads):
    orig_dtype = x.dtype
    B, S, D = x.shape
    assert D % num_heads == 0
    head_dim = D // num_heads
    group = _head_group(num_heads, head_dim, D)

    xb = x.astype(jnp.bfloat16)        # bf16 activations between kernels/layers
    for p in layer_params:
        ctx = attention_core(xb, p["wqkv"], p["bqkv"],
                             num_heads=num_heads, head_dim=head_dim, group=group)
        xb = ffn_ln_block(ctx, xb, p)
    return xb.astype(orig_dtype)


# ----------------------------------------------------------------------------
# Parameter init (PyTorch nn.Linear-style uniform bounds).
# Returns (kernel_params, ref_params): matmul weights bf16, biases/LN f32.
# ----------------------------------------------------------------------------
def init_layer_params(key, d_model, d_ff, num_heads, group):
    ks = jax.random.split(key, 12)
    hd = d_model // num_heads
    hg = num_heads // group
    ghd = group * hd
    bf = jnp.bfloat16

    def linear(kw, kb, fan_in, fan_out):
        bound = 1.0 / math.sqrt(fan_in)
        w = jax.random.uniform(kw, (fan_out, fan_in), jnp.float32, -bound, bound)
        b = jax.random.uniform(kb, (fan_out,), jnp.float32, -bound, bound)
        return w.T, b                      # (fan_in, fan_out), (fan_out,)

    wq, bq = linear(ks[0], ks[1], d_model, d_model)
    wk, bk = linear(ks[2], ks[3], d_model, d_model)
    wv, bv = linear(ks[4], ks[5], d_model, d_model)
    wo, bo = linear(ks[6], ks[7], d_model, d_model)
    w1, b1 = linear(ks[8], ks[9], d_model, d_ff)
    w2, b2 = linear(ks[10], ks[11], d_ff, d_model)

    def group_cols(w):   # (D, D) -> (HG, D, ghd)  columns grouped by head-group
        return w.reshape(d_model, hg, ghd).transpose(1, 0, 2)

    def group_bias(b):   # (D,) -> (HG, 1, ghd)
        return b.reshape(hg, 1, ghd)

    wqkv = jnp.concatenate([group_cols(wq), group_cols(wk), group_cols(wv)],
                           axis=-1).astype(bf)            # (HG, D, 3*ghd)
    bqkv = jnp.concatenate([group_bias(bq), group_bias(bk), group_bias(bv)],
                           axis=-1)                       # (HG, 1, 3*ghd) f32

    kernel_params = dict(
        wqkv=wqkv, bqkv=bqkv,
        wo=wo.astype(bf), bo=bo.reshape(1, d_model),
        w1=w1.astype(bf), b1=b1.reshape(1, d_ff),
        w2=w2.astype(bf), b2=b2.reshape(1, d_model),
        g1=jnp.ones((1, d_model), jnp.float32),
        be1=jnp.zeros((1, d_model), jnp.float32),
        g2=jnp.ones((1, d_model), jnp.float32),
        be2=jnp.zeros((1, d_model), jnp.float32),
    )
    ref_params = dict(
        wq=wq.astype(bf), bq=bq, wk=wk.astype(bf), bk=bk,
        wv=wv.astype(bf), bv=bv, wo=wo.astype(bf), bo=bo,
        w1=w1.astype(bf), b1=b1, w2=w2.astype(bf), b2=b2,
        g1=kernel_params["g1"], be1=kernel_params["be1"],
        g2=kernel_params["g2"], be2=kernel_params["be2"],
    )
    return kernel_params, ref_params


# ----------------------------------------------------------------------------
# Pure-JAX reference (same math as the PyTorch forward with dropout=identity;
# mirrors the kernel's precision policy: bf16 activations / matmul operands,
# f32 accumulation, f32 softmax / residual / LayerNorm).
# ----------------------------------------------------------------------------
def reference_layer(x_bf, rp, num_heads):
    bf = jnp.bfloat16
    B, S, D = x_bf.shape
    hd = D // num_heads

    def ln(y, g, b, eps=1e-5):
        mu = y.mean(-1, keepdims=True)
        var = ((y - mu) ** 2).mean(-1, keepdims=True)
        return (y - mu) / jnp.sqrt(var + eps) * g + b

    q = jnp.dot(x_bf, rp["wq"], preferred_element_type=jnp.float32) + rp["bq"]
    k = jnp.dot(x_bf, rp["wk"], preferred_element_type=jnp.float32) + rp["bk"]
    v = jnp.dot(x_bf, rp["wv"], preferred_element_type=jnp.float32) + rp["bv"]
    q = (q / math.sqrt(hd)).astype(bf).reshape(B, S, num_heads, hd)
    k = k.astype(bf).reshape(B, S, num_heads, hd)
    v = v.astype(bf).reshape(B, S, num_heads, hd)
    s = jnp.einsum("bqhe,bkhe->bhqk", q, k, preferred_element_type=jnp.float32)
    a = jax.nn.softmax(s, axis=-1)
    ctx = jnp.einsum("bhqk,bkhe->bqhe", a.astype(bf), v,
                     preferred_element_type=jnp.float32)
    ctx = ctx.reshape(B, S, D).astype(bf)
    attn = jnp.dot(ctx, rp["wo"], preferred_element_type=jnp.float32) + rp["bo"]
    x1 = ln(x_bf.astype(jnp.float32) + attn, rp["g1"], rp["be1"]).astype(bf)
    h = jnp.maximum(jnp.dot(x1, rp["w1"],
                            preferred_element_type=jnp.float32) + rp["b1"], 0.0)
    ff = jnp.dot(h.astype(bf), rp["w2"],
                 preferred_element_type=jnp.float32) + rp["b2"]
    return ln(x1.astype(jnp.float32) + ff, rp["g2"], rp["be2"]).astype(bf)


if __name__ == "__main__":
    B, S, D, H, DFF, LAYERS = 2, 8, 32, 4, 64, 2

    key = jax.random.PRNGKey(0)
    kx, *kls = jax.random.split(key, 1 + LAYERS)
    x = jax.random.normal(kx, (B, S, D), jnp.float32)

    head_dim = D // H
    group = _head_group(H, head_dim, D)
    both = [init_layer_params(kls[i], D, DFF, H, group) for i in range(LAYERS)]
    kernel_params = [p[0] for p in both]
    ref_params = [p[1] for p in both]

    fwd = jax.jit(functools.partial(transformer_encoder, num_heads=H))
    out = jax.block_until_ready(fwd(x, kernel_params))

    xb = x.astype(jnp.bfloat16)
    for rp in ref_params:
        xb = reference_layer(xb, rp, H)
    ref = xb.astype(jnp.float32)

    assert out.shape == (B, S, D)
    assert out.dtype == x.dtype
    assert jnp.allclose(out, ref, rtol=2e-2, atol=2e-2), "mismatch vs reference"

    print("KERNEL_OK")
</pallas_src>

<mosaic_0001>
module attributes {stable_mosaic.version = 11 : i64} {
  func.func @attn_core_kernel(%arg0: i32, %arg1: i32, %arg2: i32, %arg3: memref<1x8x32xbf16, #tpu.memory_space<vmem>>, %arg4: memref<1x32x96xbf16, #tpu.memory_space<vmem>>, %arg5: memref<1x1x96xf32, #tpu.memory_space<vmem>>, %arg6: memref<1x8x32xbf16, #tpu.memory_space<vmem>>, %arg7: memref<8x32xbf16, #tpu.memory_space<vmem>>, %arg8: memref<8x32xbf16, #tpu.memory_space<vmem>>) attributes {dimension_semantics = [#tpu.dimension_semantics<parallel>, #tpu.dimension_semantics<parallel>, #tpu.dimension_semantics<arbitrary>], iteration_bounds = array<i64: 2, 1, 1>, scalar_prefetch = 0 : i64, scratch_operands = 2 : i64, tpu.core_type = #tpu.core_type<tc>, window_params = [{transform_indices = @transform_0, window_bounds = array<i64: 1, 8, 32>}, {transform_indices = @transform_1, window_bounds = array<i64: 1, 32, 96>}, {transform_indices = @transform_2, window_bounds = array<i64: 1, 1, 96>}, {transform_indices = @transform_3, window_bounds = array<i64: 1, 8, 32>}]} {
    %c0_i32 = arith.constant 0 : i32
    %0 = arith.cmpi eq, %arg2, %c0_i32 : i32
    %1 = arith.extui %0 : i1 to i32
    %c0_i32_0 = arith.constant 0 : i32
    %2 = arith.cmpi ne, %1, %c0_i32_0 : i32
    scf.if %2 {
      %c0_20 = arith.constant 0 : index
      %c0_21 = arith.constant 0 : index
      %c0_22 = arith.constant 0 : index
      %42 = vector.load %arg3[%c0_20, %c0_21, %c0_22] : memref<1x8x32xbf16, #tpu.memory_space<vmem>>, vector<1x8x32xbf16>
      %43 = vector.shape_cast %42 : vector<1x8x32xbf16> to vector<8x32xbf16>
      %c0_23 = arith.constant 0 : index
      %c0_24 = arith.constant 0 : index
      %c32 = arith.constant 32 : index
      %44 = vector.load %arg4[%c0_23, %c0_24, %c32] : memref<1x32x96xbf16, #tpu.memory_space<vmem>>, vector<1x32x64xbf16>
      %45 = vector.shape_cast %44 : vector<1x32x64xbf16> to vector<32x64xbf16>
      %c0_25 = arith.constant 0 : index
      %c0_26 = arith.constant 0 : index
      %c32_27 = arith.constant 32 : index
      %46 = vector.load %arg5[%c0_25, %c0_26, %c32_27] : memref<1x1x96xf32, #tpu.memory_space<vmem>>, vector<1x1x64xf32>
      %47 = vector.shape_cast %46 : vector<1x1x64xf32> to vector<1x64xf32>
      %cst_28 = arith.constant dense<0.000000e+00> : vector<8x64xf32>
      %48 = tpu.matmul %43, %45, %cst_28 {dimension_numbers = #tpu.dot_dimension_numbers<[1], [0], [0], [1], [0, 0, 1, 1], [], []>} : vector<8x32xbf16>, vector<32x64xbf16>, vector<8x64xf32> -> vector<8x64xf32>
      %49 = vector.broadcast %47 : vector<1x64xf32> to vector<8x64xf32>
      %50 = arith.addf %48, %49 : vector<8x64xf32>
      %51 = vector.extract_strided_slice %50 {offsets = [0, 0], sizes = [8, 32], strides = [1, 1]} : vector<8x64xf32> to vector<8x32xf32>
      %52 = arith.truncf %51 : vector<8x32xf32> to vector<8x32xbf16>
      %c0_29 = arith.constant 0 : index
      %c0_30 = arith.constant 0 : index
      %53 = vector.load %arg7[%c0_29, %c0_30] : memref<8x32xbf16, #tpu.memory_space<vmem>>, vector<8x32xbf16>
      tpu.vector_store %arg7[%c0_29, %c0_30], %52 {strides = array<i32>} : memref<8x32xbf16, #tpu.memory_space<vmem>>, vector<8x32xbf16>,
      %54 = vector.extract_strided_slice %50 {offsets = [0, 32], sizes = [8, 32], strides = [1, 1]} : vector<8x64xf32> to vector<8x32xf32>
      %55 = arith.truncf %54 : vector<8x32xf32> to vector<8x32xbf16>
      %c0_31 = arith.constant 0 : index
      %c0_32 = arith.constant 0 : index
      %56 = vector.load %arg8[%c0_31, %c0_32] : memref<8x32xbf16, #tpu.memory_space<vmem>>, vector<8x32xbf16>
      tpu.vector_store %arg8[%c0_31, %c0_32], %55 {strides = array<i32>} : memref<8x32xbf16, #tpu.memory_space<vmem>>, vector<8x32xbf16>,
    } else {
    }
    %c8_i32 = arith.constant 8 : i32
    %3 = arith.muli %arg2, %c8_i32 : i32
    %4 = tpu.assume_multiple %3, 8 : i32
    %c0 = arith.constant 0 : index
    %5 = arith.index_cast %4 : i32 to index
    %c0_1 = arith.constant 0 : index
    %6 = vector.load %arg3[%c0, %5, %c0_1] : memref<1x8x32xbf16, #tpu.memory_space<vmem>>, vector<1x8x32xbf16>
    %7 = vector.shape_cast %6 : vector<1x8x32xbf16> to vector<8x32xbf16>
    %c0_2 = arith.constant 0 : index
    %c0_3 = arith.constant 0 : index
    %c0_4 = arith.constant 0 : index
    %8 = vector.load %arg4[%c0_2, %c0_3, %c0_4] : memref<1x32x96xbf16, #tpu.memory_space<vmem>>, vector<1x32x32xbf16>
    %9 = vector.shape_cast %8 : vector<1x32x32xbf16> to vector<32x32xbf16>
    %c0_5 = arith.constant 0 : index
    %c0_6 = arith.constant 0 : index
    %c0_7 = arith.constant 0 : index
    %10 = vector.load %arg5[%c0_5, %c0_6, %c0_7] : memref<1x1x96xf32, #tpu.memory_space<vmem>>, vector<1x1x32xf32>
    %11 = vector.shape_cast %10 : vector<1x1x32xf32> to vector<1x32xf32>
    %cst = arith.constant dense<0.000000e+00> : vector<8x32xf32>
    %12 = tpu.matmul %7, %9, %cst {dimension_numbers = #tpu.dot_dimension_numbers<[1], [0], [0], [1], [0, 0, 1, 1], [], []>} : vector<8x32xbf16>, vector<32x32xbf16>, vector<8x32xf32> -> vector<8x32xf32>
    %13 = vector.broadcast %11 : vector<1x32xf32> to vector<8x32xf32>
    %14 = arith.addf %12, %13 : vector<8x32xf32>
    %cst_8 = arith.constant 0.353553385 : f32
    %15 = vector.broadcast %cst_8 : f32 to vector<8x32xf32>
    %16 = arith.mulf %14, %15 : vector<8x32xf32>
    %17 = arith.truncf %16 : vector<8x32xf32> to vector<8x32xbf16>
    %18 = vector.shape_cast %17 : vector<8x32xbf16> to vector<8x4x8xbf16>
    %c0_9 = arith.constant 0 : index
    %c0_10 = arith.constant 0 : index
    %19 = vector.load %arg7[%c0_9, %c0_10] : memref<8x32xbf16, #tpu.memory_space<vmem>>, vector<8x32xbf16>
    %20 = vector.shape_cast %19 : vector<8x32xbf16> to vector<8x4x8xbf16>
    %c0_11 = arith.constant 0 : index
    %c0_12 = arith.constant 0 : index
    %21 = vector.load %arg8[%c0_11, %c0_12] : memref<8x32xbf16, #tpu.memory_space<vmem>>, vector<8x32xbf16>
    %22 = vector.shape_cast %21 : vector<8x32xbf16> to vector<8x4x8xbf16>
    "tpu.trace_start"() <{level = 10 : i32, message = "qhd,khd->hqk"}> : () -> ()
    %cst_13 = arith.constant dense<0.000000e+00> : vector<4x8x8xf32>
    %23 = tpu.matmul %18, %20, %cst_13 {dimension_numbers = #tpu.dot_dimension_numbers<[2], [2], [0], [0], [0, 1, 0, 0, 1, 0], [1], [1]>} : vector<8x4x8xbf16>, vector<8x4x8xbf16>, vector<4x8x8xf32> -> vector<4x8x8xf32>
    "tpu.trace_stop"() : () -> ()
    %cst_14 = arith.constant dense<0xFF800000> : vector<4x8xf32>
    %24 = vector.multi_reduction <maximumf>, %23, %cst_14 [2] : vector<4x8x8xf32> to vector<4x8xf32>
    %25 = vector.shape_cast %24 : vector<4x8xf32> to vector<4x8x1xf32>
    %26 = vector.broadcast %25 : vector<4x8x1xf32> to vector<4x8x8xf32>
    %27 = arith.subf %23, %26 : vector<4x8x8xf32>
    %28 = math.exp %27 : vector<4x8x8xf32>
    %cst_15 = arith.constant dense<0.000000e+00> : vector<4x8xf32>
    %29 = vector.multi_reduction <add>, %28, %cst_15 [2] : vector<4x8x8xf32> to vector<4x8xf32>
    %30 = vector.shape_cast %29 : vector<4x8xf32> to vector<4x8x1xf32>
    %31 = tpu.reciprocal %30 {approx = true} : vector<4x8x1xf32> -> vector<4x8x1xf32>
    %32 = vector.broadcast %31 : vector<4x8x1xf32> to vector<4x8x8xf32>
    %33 = arith.mulf %28, %32 : vector<4x8x8xf32>
    %34 = arith.truncf %33 : vector<4x8x8xf32> to vector<4x8x8xbf16>
    "tpu.trace_start"() <{level = 10 : i32, message = "hqk,khd->qhd"}> : () -> ()
    %cst_16 = arith.constant dense<0.000000e+00> : vector<4x8x8xf32>
    %35 = tpu.matmul %22, %34, %cst_16 {dimension_numbers = #tpu.dot_dimension_numbers<[0], [2], [2], [1], [0, 1, 0, 2, 1, 1], [1], [0]>} : vector<8x4x8xbf16>, vector<4x8x8xbf16>, vector<4x8x8xf32> -> vector<4x8x8xf32>
    %36 = tpu.transpose %35, [2, 0, 1] : vector<4x8x8xf32> -> vector<8x4x8xf32>
    "tpu.trace_stop"() : () -> ()
    %37 = vector.shape_cast %36 : vector<8x4x8xf32> to vector<8x32xf32>
    %38 = arith.truncf %37 : vector<8x32xf32> to vector<8x32xbf16>
    %c0_17 = arith.constant 0 : index
    %c0_18 = arith.constant 0 : index
    %c0_19 = arith.constant 0 : index
    %39 = vector.load %arg6[%c0_17, %c0_18, %c0_19] : memref<1x8x32xbf16, #tpu.memory_space<vmem>>, vector<1x8x32xbf16>
    %40 = vector.shape_cast %39 : vector<1x8x32xbf16> to vector<8x32xbf16>
    %41 = vector.shape_cast %38 : vector<8x32xbf16> to vector<1x8x32xbf16>
    tpu.vector_store %arg6[%c0_17, %c0_18, %c0_19], %41 {strides = array<i32>} : memref<1x8x32xbf16, #tpu.memory_space<vmem>>, vector<1x8x32xbf16>,
    return
  }
  func.func @transform_0(%arg0: i32, %arg1: i32, %arg2: i32) -> (i32, i32, i32) {
    %c0_i32 = arith.constant 0 : i32
    %c0_i32_0 = arith.constant 0 : i32
    %c0_i32_1 = arith.constant 0 : i32
    return %arg0, %c0_i32, %c0_i32_0 : i32, i32, i32
  }
  func.func @transform_1(%arg0: i32, %arg1: i32, %arg2: i32) -> (i32, i32, i32) {
    %c0_i32 = arith.constant 0 : i32
    %c0_i32_0 = arith.constant 0 : i32
    %c0_i32_1 = arith.constant 0 : i32
    return %arg1, %c0_i32, %c0_i32_0 : i32, i32, i32
  }
  func.func @transform_2(%arg0: i32, %arg1: i32, %arg2: i32) -> (i32, i32, i32) {
    %c0_i32 = arith.constant 0 : i32
    %c0_i32_0 = arith.constant 0 : i32
    %c0_i32_1 = arith.constant 0 : i32
    return %arg1, %c0_i32, %c0_i32_0 : i32, i32, i32
  }
  func.func @transform_3(%arg0: i32, %arg1: i32, %arg2: i32) -> (i32, i32, i32) {
    %c0_i32 = arith.constant 0 : i32
    return %arg0, %arg2, %arg1 : i32, i32, i32
  }
}

module attributes {stable_mosaic.version = 11 : i64} {
  func.func @ffn_ln_kernel(%arg0: i32, %arg1: i32, %arg2: memref<16x32xbf16, #tpu.memory_space<vmem>>, %arg3: memref<16x32xbf16, #tpu.memory_space<vmem>>, %arg4: memref<32x32xbf16, #tpu.memory_space<vmem>>, %arg5: memref<1x32xf32, #tpu.memory_space<vmem>>, %arg6: memref<1x32xf32, #tpu.memory_space<vmem>>, %arg7: memref<1x32xf32, #tpu.memory_space<vmem>>, %arg8: memref<32x64xbf16, #tpu.memory_space<vmem>>, %arg9: memref<1x64xf32, #tpu.memory_space<vmem>>, %arg10: memref<64x32xbf16, #tpu.memory_space<vmem>>, %arg11: memref<1x32xf32, #tpu.memory_space<vmem>>, %arg12: memref<1x32xf32, #tpu.memory_space<vmem>>, %arg13: memref<1x32xf32, #tpu.memory_space<vmem>>, %arg14: memref<16x32xbf16, #tpu.memory_space<vmem>>, %arg15: memref<16x32xbf16, #tpu.memory_space<vmem>>, %arg16: memref<16x32xf32, #tpu.memory_space<vmem>>) attributes {dimension_semantics = [#tpu.dimension_semantics<parallel>, #tpu.dimension_semantics<arbitrary>], iteration_bounds = array<i64: 1, 1>, scalar_prefetch = 0 : i64, scratch_operands = 2 : i64, tpu.core_type = #tpu.core_type<tc>, window_params = [{transform_indices = @transform_0, window_bounds = array<i64: 16, 32>}, {transform_indices = @transform_1, window_bounds = array<i64: 16, 32>}, {pipeline_mode = #tpu.pipeline_mode<synchronous>, transform_indices = @transform_2, window_bounds = array<i64: 32, 32>}, {pipeline_mode = #tpu.pipeline_mode<synchronous>, transform_indices = @transform_3, window_bounds = array<i64: 1, 32>}, {pipeline_mode = #tpu.pipeline_mode<synchronous>, transform_indices = @transform_4, window_bounds = array<i64: 1, 32>}, {pipeline_mode = #tpu.pipeline_mode<synchronous>, transform_indices = @transform_5, window_bounds = array<i64: 1, 32>}, {transform_indices = @transform_6, window_bounds = array<i64: 32, 64>}, {transform_indices = @transform_7, window_bounds = array<i64: 1, 64>}, {transform_indices = @transform_8, window_bounds = array<i64: 64, 32>}, {pipeline_mode = #tpu.pipeline_mode<synchronous>, transform_indices = @transform_9, window_bounds = array<i64: 1, 32>}, {pipeline_mode = #tpu.pipeline_mode<synchronous>, transform_indices = @transform_10, window_bounds = array<i64: 1, 32>}, {pipeline_mode = #tpu.pipeline_mode<synchronous>, transform_indices = @transform_11, window_bounds = array<i64: 1, 32>}, {transform_indices = @transform_12, window_bounds = array<i64: 16, 32>}]} {
    %c0_i32 = arith.constant 0 : i32
    %0 = arith.cmpi eq, %arg1, %c0_i32 : i32
    %1 = arith.extui %0 : i1 to i32
    %c0_i32_0 = arith.constant 0 : i32
    %2 = arith.cmpi ne, %1, %c0_i32_0 : i32
    scf.if %2 {
      %c0_16 = arith.constant 0 : index
      %c0_17 = arith.constant 0 : index
      %20 = vector.load %arg2[%c0_16, %c0_17] : memref<16x32xbf16, #tpu.memory_space<vmem>>, vector<16x32xbf16>
      %c0_18 = arith.constant 0 : index
      %c0_19 = arith.constant 0 : index
      %21 = vector.load %arg4[%c0_18, %c0_19] : memref<32x32xbf16, #tpu.memory_space<vmem>>, vector<32x32xbf16>
      %cst_20 = arith.constant dense<0.000000e+00> : vector<16x32xf32>
      %22 = tpu.matmul %20, %21, %cst_20 {dimension_numbers = #tpu.dot_dimension_numbers<[1], [0], [0], [1], [0, 0, 1, 1], [], []>} : vector<16x32xbf16>, vector<32x32xbf16>, vector<16x32xf32> -> vector<16x32xf32>
      %c0_21 = arith.constant 0 : index
      %c0_22 = arith.constant 0 : index
      %23 = vector.load %arg5[%c0_21, %c0_22] : memref<1x32xf32, #tpu.memory_space<vmem>>, vector<1x32xf32>
      %24 = vector.broadcast %23 : vector<1x32xf32> to vector<16x32xf32>
      %25 = arith.addf %22, %24 : vector<16x32xf32>
      %c0_23 = arith.constant 0 : index
      %c0_24 = arith.constant 0 : index
      %26 = vector.load %arg3[%c0_23, %c0_24] : memref<16x32xbf16, #tpu.memory_space<vmem>>, vector<16x32xbf16>
      %27 = arith.extf %26 : vector<16x32xbf16> to vector<16x32xf32>
      %28 = arith.addf %27, %25 : vector<16x32xf32>
      %c0_25 = arith.constant 0 : index
      %c0_26 = arith.constant 0 : index
      %29 = vector.load %arg6[%c0_25, %c0_26] : memref<1x32xf32, #tpu.memory_space<vmem>>, vector<1x32xf32>
      %c0_27 = arith.constant 0 : index
      %c0_28 = arith.constant 0 : index
      %30 = vector.load %arg7[%c0_27, %c0_28] : memref<1x32xf32, #tpu.memory_space<vmem>>, vector<1x32xf32>
      %cst_29 = arith.constant dense<0.000000e+00> : vector<16xf32>
      %31 = vector.multi_reduction <add>, %28, %cst_29 [1] : vector<16x32xf32> to vector<16xf32>
      %32 = vector.shape_cast %31 : vector<16xf32> to vector<16x1xf32>
      %cst_30 = arith.constant 3.200000e+01 : f32
      %33 = vector.broadcast %cst_30 : f32 to vector<16x1xf32>
      %34 = arith.divf %32, %33 : vector<16x1xf32>
      %35 = vector.broadcast %34 : vector<16x1xf32> to vector<16x32xf32>
      %36 = arith.subf %28, %35 : vector<16x32xf32>
      %37 = vector.broadcast %34 : vector<16x1xf32> to vector<16x32xf32>
      %38 = arith.subf %28, %37 : vector<16x32xf32>
      %39 = arith.mulf %36, %38 : vector<16x32xf32>
      %cst_31 = arith.constant dense<0.000000e+00> : vector<16xf32>
      %40 = vector.multi_reduction <add>, %39, %cst_31 [1] : vector<16x32xf32> to vector<16xf32>
      %41 = vector.shape_cast %40 : vector<16xf32> to vector<16x1xf32>
      %cst_32 = arith.constant 3.200000e+01 : f32
      %42 = vector.broadcast %cst_32 : f32 to vector<16x1xf32>
      %43 = arith.divf %41, %42 : vector<16x1xf32>
      %44 = vector.broadcast %34 : vector<16x1xf32> to vector<16x32xf32>
      %45 = arith.subf %28, %44 : vector<16x32xf32>
      %cst_33 = arith.constant 9.99999974E-6 : f32
      %46 = vector.broadcast %cst_33 : f32 to vector<16x1xf32>
      %47 = arith.addf %43, %46 : vector<16x1xf32>
      %48 = math.rsqrt %47 : vector<16x1xf32>
      %49 = vector.broadcast %48 : vector<16x1xf32> to vector<16x32xf32>
      %50 = arith.mulf %45, %49 : vector<16x32xf32>
      %51 = vector.broadcast %29 : vector<1x32xf32> to vector<16x32xf32>
      %52 = arith.mulf %50, %51 : vector<16x32xf32>
      %53 = vector.broadcast %30 : vector<1x32xf32> to vector<16x32xf32>
      %54 = arith.addf %52, %53 : vector<16x32xf32>
      %55 = arith.truncf %54 : vector<16x32xf32> to vector<16x32xbf16>
      %c0_34 = arith.constant 0 : index
      %c0_35 = arith.constant 0 : index
      %56 = vector.load %arg15[%c0_34, %c0_35] : memref<16x32xbf16, #tpu.memory_space<vmem>>, vector<16x32xbf16>
      tpu.vector_store %arg15[%c0_34, %c0_35], %55 {strides = array<i32>} : memref<16x32xbf16, #tpu.memory_space<vmem>>, vector<16x32xbf16>,
      %cst_36 = arith.constant 0.000000e+00 : f32
      %57 = vector.broadcast %cst_36 : f32 to vector<16x32xf32>
      %c0_37 = arith.constant 0 : index
      %c0_38 = arith.constant 0 : index
      %58 = vector.load %arg16[%c0_37, %c0_38] : memref<16x32xf32, #tpu.memory_space<vmem>>, vector<16x32xf32>
      tpu.vector_store %arg16[%c0_37, %c0_38], %57 {strides = array<i32>} : memref<16x32xf32, #tpu.memory_space<vmem>>, vector<16x32xf32>,
    } else {
    }
    %c0 = arith.constant 0 : index
    %c0_1 = arith.constant 0 : index
    %3 = vector.load %arg15[%c0, %c0_1] : memref<16x32xbf16, #tpu.memory_space<vmem>>, vector<16x32xbf16>
    %c0_2 = arith.constant 0 : index
    %c0_3 = arith.constant 0 : index
    %4 = vector.load %arg8[%c0_2, %c0_3] : memref<32x64xbf16, #tpu.memory_space<vmem>>, vector<32x64xbf16>
    %cst = arith.constant dense<0.000000e+00> : vector<16x64xf32>
    %5 = tpu.matmul %3, %4, %cst {dimension_numbers = #tpu.dot_dimension_numbers<[1], [0], [0], [1], [0, 0, 1, 1], [], []>} : vector<16x32xbf16>, vector<32x64xbf16>, vector<16x64xf32> -> vector<16x64xf32>
    %c0_4 = arith.constant 0 : index
    %c0_5 = arith.constant 0 : index
    %6 = vector.load %arg9[%c0_4, %c0_5] : memref<1x64xf32, #tpu.memory_space<vmem>>, vector<1x64xf32>
    %7 = vector.broadcast %6 : vector<1x64xf32> to vector<16x64xf32>
    %8 = arith.addf %5, %7 : vector<16x64xf32>
    %cst_6 = arith.constant 0.000000e+00 : f32
    %9 = vector.broadcast %cst_6 : f32 to vector<16x64xf32>
    %10 = arith.maximumf %8, %9 : vector<16x64xf32>
    %c0_7 = arith.constant 0 : index
    %c0_8 = arith.constant 0 : index
    %11 = vector.load %arg16[%c0_7, %c0_8] : memref<16x32xf32, #tpu.memory_space<vmem>>, vector<16x32xf32>
    %12 = arith.truncf %10 : vector<16x64xf32> to vector<16x64xbf16>
    %c0_9 = arith.constant 0 : index
    %c0_10 = arith.constant 0 : index
    %13 = vector.load %arg10[%c0_9, %c0_10] : memref<64x32xbf16, #tpu.memory_space<vmem>>, vector<64x32xbf16>
    %cst_11 = arith.constant dense<0.000000e+00> : vector<16x32xf32>
    %14 = tpu.matmul %12, %13, %cst_11 {dimension_numbers = #tpu.dot_dimension_numbers<[1], [0], [0], [1], [0, 0, 1, 1], [], []>} : vector<16x64xbf16>, vector<64x32xbf16>, vector<16x32xf32> -> vector<16x32xf32>
    %15 = arith.addf %11, %14 : vector<16x32xf32>
    %c0_12 = arith.constant 0 : index
    %c0_13 = arith.constant 0 : index
    %16 = vector.load %arg16[%c0_12, %c0_13] : memref<16x32xf32, #tpu.memory_space<vmem>>, vector<16x32xf32>
    tpu.vector_store %arg16[%c0_12, %c0_13], %15 {strides = array<i32>} : memref<16x32xf32, #tpu.memory_space<vmem>>, vector<16x32xf32>,
    %c0_i32_14 = arith.constant 0 : i32
    %17 = arith.cmpi eq, %arg1, %c0_i32_14 : i32
    %18 = arith.extui %17 : i1 to i32
    %c0_i32_15 = arith.constant 0 : i32
    %19 = arith.cmpi ne, %18, %c0_i32_15 : i32
    scf.if %19 {
      %c0_16 = arith.constant 0 : index
      %c0_17 = arith.constant 0 : index
      %20 = vector.load %arg15[%c0_16, %c0_17] : memref<16x32xbf16, #tpu.memory_space<vmem>>, vector<16x32xbf16>
      %21 = arith.extf %20 : vector<16x32xbf16> to vector<16x32xf32>
      %c0_18 = arith.constant 0 : index
      %c0_19 = arith.constant 0 : index
      %22 = vector.load %arg16[%c0_18, %c0_19] : memref<16x32xf32, #tpu.memory_space<vmem>>, vector<16x32xf32>
      %23 = arith.addf %21, %22 : vector<16x32xf32>
      %c0_20 = arith.constant 0 : index
      %c0_21 = arith.constant 0 : index
      %24 = vector.load %arg11[%c0_20, %c0_21] : memref<1x32xf32, #tpu.memory_space<vmem>>, vector<1x32xf32>
      %25 = vector.broadcast %24 : vector<1x32xf32> to vector<16x32xf32>
      %26 = arith.addf %23, %25 : vector<16x32xf32>
      %c0_22 = arith.constant 0 : index
      %c0_23 = arith.constant 0 : index
      %27 = vector.load %arg12[%c0_22, %c0_23] : memref<1x32xf32, #tpu.memory_space<vmem>>, vector<1x32xf32>
      %c0_24 = arith.constant 0 : index
      %c0_25 = arith.constant 0 : index
      %28 = vector.load %arg13[%c0_24, %c0_25] : memref<1x32xf32, #tpu.memory_space<vmem>>, vector<1x32xf32>
      %cst_26 = arith.constant dense<0.000000e+00> : vector<16xf32>
      %29 = vector.multi_reduction <add>, %26, %cst_26 [1] : vector<16x32xf32> to vector<16xf32>
      %30 = vector.shape_cast %29 : vector<16xf32> to vector<16x1xf32>
      %cst_27 = arith.constant 3.200000e+01 : f32
      %31 = vector.broadcast %cst_27 : f32 to vector<16x1xf32>
      %32 = arith.divf %30, %31 : vector<16x1xf32>
      %33 = vector.broadcast %32 : vector<16x1xf32> to vector<16x32xf32>
      %34 = arith.subf %26, %33 : vector<16x32xf32>
      %35 = vector.broadcast %32 : vector<16x1xf32> to vector<16x32xf32>
      %36 = arith.subf %26, %35 : vector<16x32xf32>
      %37 = arith.mulf %34, %36 : vector<16x32xf32>
      %cst_28 = arith.constant dense<0.000000e+00> : vector<16xf32>
      %38 = vector.multi_reduction <add>, %37, %cst_28 [1] : vector<16x32xf32> to vector<16xf32>
      %39 = vector.shape_cast %38 : vector<16xf32> to vector<16x1xf32>
      %cst_29 = arith.constant 3.200000e+01 : f32
      %40 = vector.broadcast %cst_29 : f32 to vector<16x1xf32>
      %41 = arith.divf %39, %40 : vector<16x1xf32>
      %42 = vector.broadcast %32 : vector<16x1xf32> to vector<16x32xf32>
      %43 = arith.subf %26, %42 : vector<16x32xf32>
      %cst_30 = arith.constant 9.99999974E-6 : f32
      %44 = vector.broadcast %cst_30 : f32 to vector<16x1xf32>
      %45 = arith.addf %41, %44 : vector<16x1xf32>
      %46 = math.rsqrt %45 : vector<16x1xf32>
      %47 = vector.broadcast %46 : vector<16x1xf32> to vector<16x32xf32>
      %48 = arith.mulf %43, %47 : vector<16x32xf32>
      %49 = vector.broadcast %27 : vector<1x32xf32> to vector<16x32xf32>
      %50 = arith.mulf %48, %49 : vector<16x32xf32>
      %51 = vector.broadcast %28 : vector<1x32xf32> to vector<16x32xf32>
      %52 = arith.addf %50, %51 : vector<16x32xf32>
      %53 = arith.truncf %52 : vector<16x32xf32> to vector<16x32xbf16>
      %c0_31 = arith.constant 0 : index
      %c0_32 = arith.constant 0 : index
      %54 = vector.load %arg14[%c0_31, %c0_32] : memref<16x32xbf16, #tpu.memory_space<vmem>>, vector<16x32xbf16>
      tpu.vector_store %arg14[%c0_31, %c0_32], %53 {strides = array<i32>} : memref<16x32xbf16, #tpu.memory_space<vmem>>, vector<16x32xbf16>,
    } else {
    }
    return
  }
  func.func @transform_0(%arg0: i32, %arg1: i32) -> (i32, i32) {
    %c0_i32 = arith.constant 0 : i32
    %c0_i32_0 = arith.constant 0 : i32
    return %arg0, %c0_i32 : i32, i32
  }
  func.func @transform_1(%arg0: i32, %arg1: i32) -> (i32, i32) {
    %c0_i32 = arith.constant 0 : i32
    %c0_i32_0 = arith.constant 0 : i32
    return %arg0, %c0_i32 : i32, i32
  }
  func.func @transform_2(%arg0: i32, %arg1: i32) -> (i32, i32) {
    %c0_i32 = arith.constant 0 : i32
    %c0_i32_0 = arith.constant 0 : i32
    %c0_i32_1 = arith.constant 0 : i32
    return %c0_i32, %c0_i32_0 : i32, i32
  }
  func.func @transform_3(%arg0: i32, %arg1: i32) -> (i32, i32) {
    %c0_i32 = arith.constant 0 : i32
    %c0_i32_0 = arith.constant 0 : i32
    %c0_i32_1 = arith.constant 0 : i32
    return %c0_i32, %c0_i32_0 : i32, i32
  }
  func.func @transform_4(%arg0: i32, %arg1: i32) -> (i32, i32) {
    %c0_i32 = arith.constant 0 : i32
    %c0_i32_0 = arith.constant 0 : i32
    %c0_i32_1 = arith.constant 0 : i32
    return %c0_i32, %c0_i32_0 : i32, i32
  }
  func.func @transform_5(%arg0: i32, %arg1: i32) -> (i32, i32) {
    %c0_i32 = arith.constant 0 : i32
    %c0_i32_0 = arith.constant 0 : i32
    %c0_i32_1 = arith.constant 0 : i32
    return %c0_i32, %c0_i32_0 : i32, i32
  }
  func.func @transform_6(%arg0: i32, %arg1: i32) -> (i32, i32) {
    %c0_i32 = arith.constant 0 : i32
    %c0_i32_0 = arith.constant 0 : i32
    return %c0_i32, %arg1 : i32, i32
  }
  func.func @transform_7(%arg0: i32, %arg1: i32) -> (i32, i32) {
    %c0_i32 = arith.constant 0 : i32
    %c0_i32_0 = arith.constant 0 : i32
    return %c0_i32, %arg1 : i32, i32
  }
  func.func @transform_8(%arg0: i32, %arg1: i32) -> (i32, i32) {
    %c0_i32 = arith.constant 0 : i32
    %c0_i32_0 = arith.constant 0 : i32
    return %arg1, %c0_i32 : i32, i32
  }
  func.func @transform_9(%arg0: i32, %arg1: i32) -> (i32, i32) {
    %c0_i32 = arith.constant 0 : i32
    %c0_i32_0 = arith.constant 0 : i32
    %c0_i32_1 = arith.constant 0 : i32
    return %c0_i32, %c0_i32_0 : i32, i32
  }
  func.func @transform_10(%arg0: i32, %arg1: i32) -> (i32, i32) {
    %c0_i32 = arith.constant 0 : i32
    %c0_i32_0 = arith.constant 0 : i32
    %c0_i32_1 = arith.constant 0 : i32
    return %c0_i32, %c0_i32_0 : i32, i32
  }
  func.func @transform_11(%arg0: i32, %arg1: i32) -> (i32, i32) {
    %c0_i32 = arith.constant 0 : i32
    %c0_i32_0 = arith.constant 0 : i32
    %c0_i32_1 = arith.constant 0 : i32
    return %c0_i32, %c0_i32_0 : i32, i32
  }
  func.func @transform_12(%arg0: i32, %arg1: i32) -> (i32, i32) {
    %c0_i32 = arith.constant 0 : i32
    %c0_i32_0 = arith.constant 0 : i32
    return %arg0, %c0_i32 : i32, i32
  }
}

module attributes {stable_mosaic.version = 11 : i64} {
  func.func @ffn_ln_kernel(%arg0: i32, %arg1: i32, %arg2: memref<16x32xbf16, #tpu.memory_space<vmem>>, %arg3: memref<16x32xbf16, #tpu.memory_space<vmem>>, %arg4: memref<32x32xbf16, #tpu.memory_space<vmem>>, %arg5: memref<1x32xf32, #tpu.memory_space<vmem>>, %arg6: memref<1x32xf32, #tpu.memory_space<vmem>>, %arg7: memref<1x32xf32, #tpu.memory_space<vmem>>, %arg8: memref<32x64xbf16, #tpu.memory_space<vmem>>, %arg9: memref<1x64xf32, #tpu.memory_space<vmem>>, %arg10: memref<64x32xbf16, #tpu.memory_space<vmem>>, %arg11: memref<1x32xf32, #tpu.memory_space<vmem>>, %arg12: memref<1x32xf32, #tpu.memory_space<vmem>>, %arg13: memref<1x32xf32, #tpu.memory_space<vmem>>, %arg14: memref<16x32xbf16, #tpu.memory_space<vmem>>, %arg15: memref<16x32xbf16, #tpu.memory_space<vmem>>, %arg16: memref<16x32xf32, #tpu.memory_space<vmem>>) attributes {dimension_semantics = [#tpu.dimension_semantics<parallel>, #tpu.dimension_semantics<arbitrary>], iteration_bounds = array<i64: 1, 1>, scalar_prefetch = 0 : i64, scratch_operands = 2 : i64, tpu.core_type = #tpu.core_type<tc>, window_params = [{transform_indices = @transform_0, window_bounds = array<i64: 16, 32>}, {transform_indices = @transform_1, window_bounds = array<i64: 16, 32>}, {pipeline_mode = #tpu.pipeline_mode<synchronous>, transform_indices = @transform_2, window_bounds = array<i64: 32, 32>}, {pipeline_mode = #tpu.pipeline_mode<synchronous>, transform_indices = @transform_3, window_bounds = array<i64: 1, 32>}, {pipeline_mode = #tpu.pipeline_mode<synchronous>, transform_indices = @transform_4, window_bounds = array<i64: 1, 32>}, {pipeline_mode = #tpu.pipeline_mode<synchronous>, transform_indices = @transform_5, window_bounds = array<i64: 1, 32>}, {transform_indices = @transform_6, window_bounds = array<i64: 32, 64>}, {transform_indices = @transform_7, window_bounds = array<i64: 1, 64>}, {transform_indices = @transform_8, window_bounds = array<i64: 64, 32>}, {pipeline_mode = #tpu.pipeline_mode<synchronous>, transform_indices = @transform_9, window_bounds = array<i64: 1, 32>}, {pipeline_mode = #tpu.pipeline_mode<synchronous>, transform_indices = @transform_10, window_bounds = array<i64: 1, 32>}, {pipeline_mode = #tpu.pipeline_mode<synchronous>, transform_indices = @transform_11, window_bounds = array<i64: 1, 32>}, {transform_indices = @transform_12, window_bounds = array<i64: 16, 32>}]} {
    %c0_i32 = arith.constant 0 : i32
    %0 = arith.cmpi eq, %arg1, %c0_i32 : i32
    %1 = arith.extui %0 : i1 to i32
    %c0_i32_0 = arith.constant 0 : i32
    %2 = arith.cmpi ne, %1, %c0_i32_0 : i32
    scf.if %2 {
      %c0_16 = arith.constant 0 : index
      %c0_17 = arith.constant 0 : index
      %20 = vector.load %arg2[%c0_16, %c0_17] : memref<16x32xbf16, #tpu.memory_space<vmem>>, vector<16x32xbf16>
      %c0_18 = arith.constant 0 : index
      %c0_19 = arith.constant 0 : index
      %21 = vector.load %arg4[%c0_18, %c0_19] : memref<32x32xbf16, #tpu.memory_space<vmem>>, vector<32x32xbf16>
      %cst_20 = arith.constant dense<0.000000e+00> : vector<16x32xf32>
      %22 = tpu.matmul %20, %21, %cst_20 {dimension_numbers = #tpu.dot_dimension_numbers<[1], [0], [0], [1], [0, 0, 1, 1], [], []>} : vector<16x32xbf16>, vector<32x32xbf16>, vector<16x32xf32> -> vector<16x32xf32>
      %c0_21 = arith.constant 0 : index
      %c0_22 = arith.constant 0 : index
      %23 = vector.load %arg5[%c0_21, %c0_22] : memref<1x32xf32, #tpu.memory_space<vmem>>, vector<1x32xf32>
      %24 = vector.broadcast %23 : vector<1x32xf32> to vector<16x32xf32>
      %25 = arith.addf %22, %24 : vector<16x32xf32>
      %c0_23 = arith.constant 0 : index
      %c0_24 = arith.constant 0 : index
      %26 = vector.load %arg3[%c0_23, %c0_24] : memref<16x32xbf16, #tpu.memory_space<vmem>>, vector<16x32xbf16>
      %27 = arith.extf %26 : vector<16x32xbf16> to vector<16x32xf32>
      %28 = arith.addf %27, %25 : vector<16x32xf32>
      %c0_25 = arith.constant 0 : index
      %c0_26 = arith.constant 0 : index
      %29 = vector.load %arg6[%c0_25, %c0_26] : memref<1x32xf32, #tpu.memory_space<vmem>>, vector<1x32xf32>
      %c0_27 = arith.constant 0 : index
      %c0_28 = arith.constant 0 : index
      %30 = vector.load %arg7[%c0_27, %c0_28] : memref<1x32xf32, #tpu.memory_space<vmem>>, vector<1x32xf32>
      %cst_29 = arith.constant dense<0.000000e+00> : vector<16xf32>
      %31 = vector.multi_reduction <add>, %28, %cst_29 [1] : vector<16x32xf32> to vector<16xf32>
      %32 = vector.shape_cast %31 : vector<16xf32> to vector<16x1xf32>
      %cst_30 = arith.constant 3.200000e+01 : f32
      %33 = vector.broadcast %cst_30 : f32 to vector<16x1xf32>
      %34 = arith.divf %32, %33 : vector<16x1xf32>
      %35 = vector.broadcast %34 : vector<16x1xf32> to vector<16x32xf32>
      %36 = arith.subf %28, %35 : vector<16x32xf32>
      %37 = vector.broadcast %34 : vector<16x1xf32> to vector<16x32xf32>
      %38 = arith.subf %28, %37 : vector<16x32xf32>
      %39 = arith.mulf %36, %38 : vector<16x32xf32>
      %cst_31 = arith.constant dense<0.000000e+00> : vector<16xf32>
      %40 = vector.multi_reduction <add>, %39, %cst_31 [1] : vector<16x32xf32> to vector<16xf32>
      %41 = vector.shape_cast %40 : vector<16xf32> to vector<16x1xf32>
      %cst_32 = arith.constant 3.200000e+01 : f32
      %42 = vector.broadcast %cst_32 : f32 to vector<16x1xf32>
      %43 = arith.divf %41, %42 : vector<16x1xf32>
      %44 = vector.broadcast %34 : vector<16x1xf32> to vector<16x32xf32>
      %45 = arith.subf %28, %44 : vector<16x32xf32>
      %cst_33 = arith.constant 9.99999974E-6 : f32
      %46 = vector.broadcast %cst_33 : f32 to vector<16x1xf32>
      %47 = arith.addf %43, %46 : vector<16x1xf32>
      %48 = math.rsqrt %47 : vector<16x1xf32>
      %49 = vector.broadcast %48 : vector<16x1xf32> to vector<16x32xf32>
      %50 = arith.mulf %45, %49 : vector<16x32xf32>
      %51 = vector.broadcast %29 : vector<1x32xf32> to vector<16x32xf32>
      %52 = arith.mulf %50, %51 : vector<16x32xf32>
      %53 = vector.broadcast %30 : vector<1x32xf32> to vector<16x32xf32>
      %54 = arith.addf %52, %53 : vector<16x32xf32>
      %55 = arith.truncf %54 : vector<16x32xf32> to vector<16x32xbf16>
      %c0_34 = arith.constant 0 : index
      %c0_35 = arith.constant 0 : index
      %56 = vector.load %arg15[%c0_34, %c0_35] : memref<16x32xbf16, #tpu.memory_space<vmem>>, vector<16x32xbf16>
      tpu.vector_store %arg15[%c0_34, %c0_35], %55 {strides = array<i32>} : memref<16x32xbf16, #tpu.memory_space<vmem>>, vector<16x32xbf16>,
      %cst_36 = arith.constant 0.000000e+00 : f32
      %57 = vector.broadcast %cst_36 : f32 to vector<16x32xf32>
      %c0_37 = arith.constant 0 : index
      %c0_38 = arith.constant 0 : index
      %58 = vector.load %arg16[%c0_37, %c0_38] : memref<16x32xf32, #tpu.memory_space<vmem>>, vector<16x32xf32>
      tpu.vector_store %arg16[%c0_37, %c0_38], %57 {strides = array<i32>} : memref<16x32xf32, #tpu.memory_space<vmem>>, vector<16x32xf32>,
    } else {
    }
    %c0 = arith.constant 0 : index
    %c0_1 = arith.constant 0 : index
    %3 = vector.load %arg15[%c0, %c0_1] : memref<16x32xbf16, #tpu.memory_space<vmem>>, vector<16x32xbf16>
    %c0_2 = arith.constant 0 : index
    %c0_3 = arith.constant 0 : index
    %4 = vector.load %arg8[%c0_2, %c0_3] : memref<32x64xbf16, #tpu.memory_space<vmem>>, vector<32x64xbf16>
    %cst = arith.constant dense<0.000000e+00> : vector<16x64xf32>
    %5 = tpu.matmul %3, %4, %cst {dimension_numbers = #tpu.dot_dimension_numbers<[1], [0], [0], [1], [0, 0, 1, 1], [], []>} : vector<16x32xbf16>, vector<32x64xbf16>, vector<16x64xf32> -> vector<16x64xf32>
    %c0_4 = arith.constant 0 : index
    %c0_5 = arith.constant 0 : index
    %6 = vector.load %arg9[%c0_4, %c0_5] : memref<1x64xf32, #tpu.memory_space<vmem>>, vector<1x64xf32>
    %7 = vector.broadcast %6 : vector<1x64xf32> to vector<16x64xf32>
    %8 = arith.addf %5, %7 : vector<16x64xf32>
    %cst_6 = arith.constant 0.000000e+00 : f32
    %9 = vector.broadcast %cst_6 : f32 to vector<16x64xf32>
    %10 = arith.maximumf %8, %9 : vector<16x64xf32>
    %c0_7 = arith.constant 0 : index
    %c0_8 = arith.constant 0 : index
    %11 = vector.load %arg16[%c0_7, %c0_8] : memref<16x32xf32, #tpu.memory_space<vmem>>, vector<16x32xf32>
    %12 = arith.truncf %10 : vector<16x64xf32> to vector<16x64xbf16>
    %c0_9 = arith.constant 0 : index
    %c0_10 = arith.constant 0 : index
    %13 = vector.load %arg10[%c0_9, %c0_10] : memref<64x32xbf16, #tpu.memory_space<vmem>>, vector<64x32xbf16>
    %cst_11 = arith.constant dense<0.000000e+00> : vector<16x32xf32>
    %14 = tpu.matmul %12, %13, %cst_11 {dimension_numbers = #tpu.dot_dimension_numbers<[1], [0], [0], [1], [0, 0, 1, 1], [], []>} : vector<16x64xbf16>, vector<64x32xbf16>, vector<16x32xf32> -> vector<16x32xf32>
    %15 = arith.addf %11, %14 : vector<16x32xf32>
    %c0_12 = arith.constant 0 : index
    %c0_13 = arith.constant 0 : index
    %16 = vector.load %arg16[%c0_12, %c0_13] : memref<16x32xf32, #tpu.memory_space<vmem>>, vector<16x32xf32>
    tpu.vector_store %arg16[%c0_12, %c0_13], %15 {strides = array<i32>} : memref<16x32xf32, #tpu.memory_space<vmem>>, vector<16x32xf32>,
    %c0_i32_14 = arith.constant 0 : i32
    %17 = arith.cmpi eq, %arg1, %c0_i32_14 : i32
    %18 = arith.extui %17 : i1 to i32
    %c0_i32_15 = arith.constant 0 : i32
    %19 = arith.cmpi ne, %18, %c0_i32_15 : i32
    scf.if %19 {
      %c0_16 = arith.constant 0 : index
      %c0_17 = arith.constant 0 : index
      %20 = vector.load %arg15[%c0_16, %c0_17] : memref<16x32xbf16, #tpu.memory_space<vmem>>, vector<16x32xbf16>
      %21 = arith.extf %20 : vector<16x32xbf16> to vector<16x32xf32>
      %c0_18 = arith.constant 0 : index
      %c0_19 = arith.constant 0 : index
      %22 = vector.load %arg16[%c0_18, %c0_19] : memref<16x32xf32, #tpu.memory_space<vmem>>, vector<16x32xf32>
      %23 = arith.addf %21, %22 : vector<16x32xf32>
      %c0_20 = arith.constant 0 : index
      %c0_21 = arith.constant 0 : index
      %24 = vector.load %arg11[%c0_20, %c0_21] : memref<1x32xf32, #tpu.memory_space<vmem>>, vector<1x32xf32>
      %25 = vector.broadcast %24 : vector<1x32xf32> to vector<16x32xf32>
      %26 = arith.addf %23, %25 : vector<16x32xf32>
      %c0_22 = arith.constant 0 : index
      %c0_23 = arith.constant 0 : index
      %27 = vector.load %arg12[%c0_22, %c0_23] : memref<1x32xf32, #tpu.memory_space<vmem>>, vector<1x32xf32>
      %c0_24 = arith.constant 0 : index
      %c0_25 = arith.constant 0 : index
      %28 = vector.load %arg13[%c0_24, %c0_25] : memref<1x32xf32, #tpu.memory_space<vmem>>, vector<1x32xf32>
      %cst_26 = arith.constant dense<0.000000e+00> : vector<16xf32>
      %29 = vector.multi_reduction <add>, %26, %cst_26 [1] : vector<16x32xf32> to vector<16xf32>
      %30 = vector.shape_cast %29 : vector<16xf32> to vector<16x1xf32>
      %cst_27 = arith.constant 3.200000e+01 : f32
      %31 = vector.broadcast %cst_27 : f32 to vector<16x1xf32>
      %32 = arith.divf %30, %31 : vector<16x1xf32>
      %33 = vector.broadcast %32 : vector<16x1xf32> to vector<16x32xf32>
      %34 = arith.subf %26, %33 : vector<16x32xf32>
      %35 = vector.broadcast %32 : vector<16x1xf32> to vector<16x32xf32>
      %36 = arith.subf %26, %35 : vector<16x32xf32>
      %37 = arith.mulf %34, %36 : vector<16x32xf32>
      %cst_28 = arith.constant dense<0.000000e+00> : vector<16xf32>
      %38 = vector.multi_reduction <add>, %37, %cst_28 [1] : vector<16x32xf32> to vector<16xf32>
      %39 = vector.shape_cast %38 : vector<16xf32> to vector<16x1xf32>
      %cst_29 = arith.constant 3.200000e+01 : f32
      %40 = vector.broadcast %cst_29 : f32 to vector<16x1xf32>
      %41 = arith.divf %39, %40 : vector<16x1xf32>
      %42 = vector.broadcast %32 : vector<16x1xf32> to vector<16x32xf32>
      %43 = arith.subf %26, %42 : vector<16x32xf32>
      %cst_30 = arith.constant 9.99999974E-6 : f32
      %44 = vector.broadcast %cst_30 : f32 to vector<16x1xf32>
      %45 = arith.addf %41, %44 : vector<16x1xf32>
      %46 = math.rsqrt %45 : vector<16x1xf32>
      %47 = vector.broadcast %46 : vector<16x1xf32> to vector<16x32xf32>
      %48 = arith.mulf %43, %47 : vector<16x32xf32>
      %49 = vector.broadcast %27 : vector<1x32xf32> to vector<16x32xf32>
      %50 = arith.mulf %48, %49 : vector<16x32xf32>
      %51 = vector.broadcast %28 : vector<1x32xf32> to vector<16x32xf32>
      %52 = arith.addf %50, %51 : vector<16x32xf32>
      %53 = arith.truncf %52 : vector<16x32xf32> to vector<16x32xbf16>
      %c0_31 = arith.constant 0 : index
      %c0_32 = arith.constant 0 : index
      %54 = vector.load %arg14[%c0_31, %c0_32] : memref<16x32xbf16, #tpu.memory_space<vmem>>, vector<16x32xbf16>
      tpu.vector_store %arg14[%c0_31, %c0_32], %53 {strides = array<i32>} : memref<16x32xbf16, #tpu.memory_space<vmem>>, vector<16x32xbf16>,
    } else {
    }
    return
  }
  func.func @transform_0(%arg0: i32, %arg1: i32) -> (i32, i32) {
    %c0_i32 = arith.constant 0 : i32
    %c0_i32_0 = arith.constant 0 : i32
    return %arg0, %c0_i32 : i32, i32
  }
  func.func @transform_1(%arg0: i32, %arg1: i32) -> (i32, i32) {
    %c0_i32 = arith.constant 0 : i32
    %c0_i32_0 = arith.constant 0 : i32
    return %arg0, %c0_i32 : i32, i32
  }
  func.func @transform_2(%arg0: i32, %arg1: i32) -> (i32, i32) {
    %c0_i32 = arith.constant 0 : i32
    %c0_i32_0 = arith.constant 0 : i32
    %c0_i32_1 = arith.constant 0 : i32
    return %c0_i32, %c0_i32_0 : i32, i32
  }
  func.func @transform_3(%arg0: i32, %arg1: i32) -> (i32, i32) {
    %c0_i32 = arith.constant 0 : i32
    %c0_i32_0 = arith.constant 0 : i32
    %c0_i32_1 = arith.constant 0 : i32
    return %c0_i32, %c0_i32_0 : i32, i32
  }
  func.func @transform_4(%arg0: i32, %arg1: i32) -> (i32, i32) {
    %c0_i32 = arith.constant 0 : i32
    %c0_i32_0 = arith.constant 0 : i32
    %c0_i32_1 = arith.constant 0 : i32
    return %c0_i32, %c0_i32_0 : i32, i32
  }
  func.func @transform_5(%arg0: i32, %arg1: i32) -> (i32, i32) {
    %c0_i32 = arith.constant 0 : i32
    %c0_i32_0 = arith.constant 0 : i32
    %c0_i32_1 = arith.constant 0 : i32
    return %c0_i32, %c0_i32_0 : i32, i32
  }
  func.func @transform_6(%arg0: i32, %arg1: i32) -> (i32, i32) {
    %c0_i32 = arith.constant 0 : i32
    %c0_i32_0 = arith.constant 0 : i32
    return %c0_i32, %arg1 : i32, i32
  }
  func.func @transform_7(%arg0: i32, %arg1: i32) -> (i32, i32) {
    %c0_i32 = arith.constant 0 : i32
    %c0_i32_0 = arith.constant 0 : i32
    return %c0_i32, %arg1 : i32, i32
  }
  func.func @transform_8(%arg0: i32, %arg1: i32) -> (i32, i32) {
    %c0_i32 = arith.constant 0 : i32
    %c0_i32_0 = arith.constant 0 : i32
    return %arg1, %c0_i32 : i32, i32
  }
  func.func @transform_9(%arg0: i32, %arg1: i32) -> (i32, i32) {
    %c0_i32 = arith.constant 0 : i32
    %c0_i32_0 = arith.constant 0 : i32
    %c0_i32_1 = arith.constant 0 : i32
    return %c0_i32, %c0_i32_0 : i32, i32
  }
  func.func @transform_10(%arg0: i32, %arg1: i32) -> (i32, i32) {
    %c0_i32 = arith.constant 0 : i32
    %c0_i32_0 = arith.constant 0 : i32
    %c0_i32_1 = arith.constant 0 : i32
    return %c0_i32, %c0_i32_0 : i32, i32
  }
  func.func @transform_11(%arg0: i32, %arg1: i32) -> (i32, i32) {
    %c0_i32 = arith.constant 0 : i32
    %c0_i32_0 = arith.constant 0 : i32
    %c0_i32_1 = arith.constant 0 : i32
    return %c0_i32, %c0_i32_0 : i32, i32
  }
  func.func @transform_12(%arg0: i32, %arg1: i32) -> (i32, i32) {
    %c0_i32 = arith.constant 0 : i32
    %c0_i32_0 = arith.constant 0 : i32
    return %arg0, %c0_i32 : i32, i32
  }
}

</mosaic_0001>

<llo_original>
// kernel: transformer_encoder.7
$region0: #{transformer_encoder.7}
  #allocation0 [shape = 'u32[]', space=smem, size = 0x4, offset = 0x4, fixed_abs, tag = 'smem constant byte address 0x4 - core index']
  #allocation1 [shape = 'u32[72,128]{1,0:T(1,128)}', space=vmem, size = 0x9000, scoped, tag = 'internal scratch']
  #allocation2 [shape = 'bf16[16,32]{1,0:T(8,128)(2,1)}', space=vmem, size = 0x1000, scoped, tag = 'scratch operand']
  #allocation3 [shape = 'f32[16,32]{1,0:T(8,128)}', space=vmem, size = 0x2000, scoped, tag = 'scratch operand']
  %s0 = inlined_call_operand.vmem [shape: bf16[16,32], index: 0, kind: input, shape index: {}, may-alias: {0,12}]
  %s1 = inlined_call_operand.vmem [shape: bf16[16,32], index: 1, kind: input, shape index: {}]
  %s2 = inlined_call_operand.vmem [shape: bf16[32,32], index: 2, kind: input, shape index: {}]
  %s3 = inlined_call_operand.vmem [shape: f32[1,32], index: 3, kind: input, shape index: {}]
  %s4 = inlined_call_operand.vmem [shape: f32[1,32], index: 4, kind: input, shape index: {}]
  %s5 = inlined_call_operand.vmem [shape: f32[1,32], index: 5, kind: input, shape index: {}]
  %s6 = inlined_call_operand.vmem [shape: bf16[32,64], index: 6, kind: input, shape index: {}]
  %s7 = inlined_call_operand.vmem [shape: f32[1,64], index: 7, kind: input, shape index: {}]
  %s8 = inlined_call_operand.vmem [shape: bf16[64,32], index: 8, kind: input, shape index: {}]
  %s9 = inlined_call_operand.vmem [shape: f32[1,32], index: 9, kind: input, shape index: {}]
  %s10 = inlined_call_operand.vmem [shape: f32[1,32], index: 10, kind: input, shape index: {}]
  %s11 = inlined_call_operand.vmem [shape: f32[1,32], index: 11, kind: input, shape index: {}]
  %s12 = inlined_call_operand.vmem [shape: bf16[16,32], index: 12, kind: output, shape index: {}, may-alias: {0,12}]
  %s13 = sld [smem:[#allocation0]]
  $region66: #{transformer_encoder.7} parent=0
    _
  %s15 = ssub.s32 1, %s13
  %s16 = scalar_select 0, %s15, %s13
  // Predicated region
  $region2: #{transformer_encoder.7} parent=0 // pred_check
    _
  $region3: #{transformer_encoder.7} parent=0 // pred_check_branch
    %18 = sbr.rel (0) target = $region5
  $region4: #{transformer_encoder.7} parent=0 // pred_region
    _
  $region5: #{transformer_encoder.7} parent=0 // pred_fallthru
    _
  // Predicated region
  $region6: #{transformer_encoder.7} parent=0 // pred_check
    _
  $region7: #{transformer_encoder.7} parent=0 // pred_check_branch
    %20 = sbr.rel (0) target = $region9
  $region8: #{transformer_encoder.7} parent=0 // pred_region
    _
  $region9: #{transformer_encoder.7} parent=0 // pred_fallthru
    _
  // Predicated region
  $region10: #{transformer_encoder.7} parent=0 // pred_check
    _
  $region11: #{transformer_encoder.7} parent=0 // pred_check_branch
    %22 = sbr.rel (0) target = $region13
  $region12: #{transformer_encoder.7} parent=0 // pred_region
    _
  $region13: #{transformer_encoder.7} parent=0 // pred_fallthru
    _
  // Predicated region
  $region14: #{transformer_encoder.7} parent=0 // pred_check
    _
  $region15: #{transformer_encoder.7} parent=0 // pred_check_branch
    %24 = sbr.rel (0) target = $region17
  $region16: #{transformer_encoder.7} parent=0 // pred_region
    _
  $region17: #{transformer_encoder.7} parent=0 // pred_fallthru
    _
  // Predicated region
  $region18: #{transformer_encoder.7} parent=0 // pred_check
    _
  $region19: #{transformer_encoder.7} parent=0 // pred_check_branch
    %26 = sbr.rel (0) target = $region21
  $region20: #{transformer_encoder.7} parent=0 // pred_region
    _
  $region21: #{transformer_encoder.7} parent=0 // pred_fallthru
    _
  // Predicated region
  $region22: #{transformer_encoder.7} parent=0 // pred_check
    _
  $region23: #{transformer_encoder.7} parent=0 // pred_check_branch
    %28 = sbr.rel (0) target = $region25
  $region24: #{transformer_encoder.7} parent=0 // pred_region
    _
  $region25: #{transformer_encoder.7} parent=0 // pred_fallthru
    _
  // Predicated region
  $region26: #{transformer_encoder.7} parent=0 // pred_check
    _
  $region27: #{transformer_encoder.7} parent=0 // pred_check_branch
    %30 = sbr.rel (0) target = $region29
  $region28: #{transformer_encoder.7} parent=0 // pred_region
    _
  $region29: #{transformer_encoder.7} parent=0 // pred_fallthru
    _
  // Predicated region
  $region30: #{transformer_encoder.7} parent=0 // pred_check
    _
  $region31: #{transformer_encoder.7} parent=0 // pred_check_branch
    %32 = sbr.rel (0) target = $region33
  $region32: #{transformer_encoder.7} parent=0 // pred_region
    _
  $region33: #{transformer_encoder.7} parent=0 // pred_fallthru
    _
  // Predicated region
  $region34: #{transformer_encoder.7} parent=0 // pred_check
    _
  $region35: #{transformer_encoder.7} parent=0 // pred_check_branch
    %34 = sbr.rel (0) target = $region37
  $region36: #{transformer_encoder.7} parent=0 // pred_region
    _
  $region37: #{transformer_encoder.7} parent=0 // pred_fallthru
    _
  // Predicated region
  $region38: #{transformer_encoder.7} parent=0 // pred_check
    _
  $region39: #{transformer_encoder.7} parent=0 // pred_check_branch
    %36 = sbr.rel (0) target = $region41
  $region40: #{transformer_encoder.7} parent=0 // pred_region
    _
  $region41: #{transformer_encoder.7} parent=0 // pred_fallthru
    _
  // Predicated region
  $region42: #{transformer_encoder.7} parent=0 // pred_check
    _
  $region43: #{transformer_encoder.7} parent=0 // pred_check_branch
    %38 = sbr.rel (0) target = $region45
  $region44: #{transformer_encoder.7} parent=0 // pred_region
    _
  $region45: #{transformer_encoder.7} parent=0 // pred_fallthru
    _
  // Predicated region
  $region46: #{transformer_encoder.7} parent=0 // pred_check
    _
  $region47: #{transformer_encoder.7} parent=0 // pred_check_branch
    %40 = sbr.rel (0) target = $region49
  $region48: #{transformer_encoder.7} parent=0 // pred_region
    _
  $region49: #{transformer_encoder.7} parent=0 // pred_fallthru
    _
  %p42 = scmp.eq.s32.totalorder 0, 0
  // Predicated region
  $region50: #{transformer_encoder.7} parent=0 // pred_check
    %p43 = pneg %p42
  $region51: #{transformer_encoder.7} parent=0 // pred_check_branch
    %45 = sbr.rel (%p43) target = $region53
  $region52: #{transformer_encoder.7} parent=0 // pred_region
    %v46 = vld [vmem:[%s0] sm:$0xf]
    %v47 = vld [vmem:[%s0 + $0x4] sm:$0xf]
    %v48 = vld [vmem:[%s2] sm:$0xf]
    %v49 = vld [vmem:[%s2 + $0x4] sm:$0xf]
    %v50 = vld [vmem:[%s2 + $0x8] sm:$0xf]
    %v51 = vld [vmem:[%s2 + $0xc] sm:$0xf]
    %v52 = vld [vmem:[%s3] sm:$0x1]
    %v54 = vperm.slane %v52, 0
    %v58 = vunpack.c.l.b16 %v46
    %v59 = vunpack.c.l.b16 %v47
    %v60 = vpack.c.b16 %v59, %v58
    %v65 = vunpack.c.l.b16 %v48
    %v66 = vunpack.c.l.b16 %v49
    %v67 = vunpack.c.l.b16 %v50
    %v68 = vunpack.c.l.b16 %v51
    %v69 = vpack.c.b16 %v66, %v65
    %v70 = vpack.c.b16 %v68, %v67
    %vm73 = vcmask 261120
    %v75 = vsel %vm73, %v60, 0
    %77 = vmatpush.bf16.msra.mxu0 0
    %78 = vmatpush.bf16.msra.mxu0 0
    %79 = vmatpush.bf16.msra.mxu0 0
    %80 = vmatpush.bf16.msra.mxu0 0
    %81 = vmatpush.bf16.msra.mxu0 0
    %82 = vmatpush.bf16.msra.mxu0 0
    %83 = vmatpush.bf16.msra.mxu0 %v70
    %84 = vmatpush.bf16.msra.mxu0 %v69
    %85 = vmatmul.bf16.gmra.mxu0 %v75
    %v86 = vpop.f32.mrf.mxu0
    %v87 = vadd.f32 %v54, %v86
    %v88 = vpop.f32.mrf.mxu0
    %v89 = vadd.f32 %v54, %v88
    %90 = vdwg.mxu0
    %v91 = vld [vmem:[%s1] sm:$0xf]
    %v92 = vld [vmem:[%s1 + $0x4] sm:$0xf]
    %v93 = vunpack.c.l.bf16 %v91
    %v94 = vunpack.c.l.bf16 %v92
    %v95 = vadd.f32 %v93, %v87
    %v96 = vadd.f32 %v94, %v89
    %v97 = vld [vmem:[%s4] sm:$0x1]
    %v98 = vld [vmem:[%s5] sm:$0x1]
    %v99 = vsel %vm73, %v95, 0.0
    %100 = vadd.xlane.f32.xlu0 %v99
    %v101 = vpop.xlane.xlu0 %100
    %v102 = vsel %vm73, %v96, 0.0
    %103 = vadd.xlane.f32.xlu0 %v102
    %v104 = vpop.xlane.xlu0 %103
    %v105 = vrcp.pop 32.0
    %v106 = vmul.f32 32.0, %v105
    %v107 = vsub.f32 1.0, %v106
    %v108 = vmul.f32 %v105, %v107
    %v109 = vadd.f32 %v105, %v108
    %vm110 = vweird.f32 %v105
    %v111 = vsel %vm110, %v105, %v109
    %v112 = vmul.f32 %v101, %v111
    %v113 = vmul.f32 %v104, %v111
    %v114 = vsub.f32 %v95, %v112
    %v115 = vsub.f32 %v96, %v113
    %v116 = vmul.f32 %v114, %v114
    %v117 = vmul.f32 %v115, %v115
    %v118 = vsel %vm73, %v116, 0.0
    %119 = vadd.xlane.f32.xlu0 %v118
    %v120 = vpop.xlane.xlu0 %119
    %v121 = vsel %vm73, %v117, 0.0
    %122 = vadd.xlane.f32.xlu0 %v121
    %v123 = vpop.xlane.xlu0 %122
    %v124 = vmul.f32 %v120, %v111
    %v125 = vmul.f32 %v123, %v111
    %v126 = vadd.f32 %v124, 1e-05
    %v127 = vadd.f32 %v125, 1e-05
    %v128 = vrsqrt.pop %v126
    %v129 = vmul.f32 %v128, %v126
    %v130 = vmul.f32 %v129, %v128
    %v131 = vmul.f32 0.5, %v130
    %v132 = vsub.f32 1.5, %v131
    %v133 = vmul.f32 %v128, %v132
    %vm134 = vweird.f32 %v126
    %vm135 = vweird.f32 %v128
    %vm136 = vmor %vm134, %vm135
    %v137 = vsel %vm136, %v128, %v133
    %v138 = vrsqrt.pop %v127
    %v139 = vmul.f32 %v138, %v127
    %v140 = vmul.f32 %v139, %v138
    %v141 = vmul.f32 0.5, %v140
    %v142 = vsub.f32 1.5, %v141
    %v143 = vmul.f32 %v138, %v142
    %vm144 = vweird.f32 %v127
    %vm145 = vweird.f32 %v138
    %vm146 = vmor %vm144, %vm145
    %v147 = vsel %vm146, %v138, %v143
    %v148 = vmul.f32 %v114, %v137
    %v149 = vmul.f32 %v115, %v147
    %v151 = vperm.slane %v97, 0
    %v153 = vmul.f32 %v148, %v151
    %v154 = vmul.f32 %v149, %v151
    %v156 = vperm.slane %v98, 0
    %v158 = vadd.f32 %v153, %v156
    %v159 = vadd.f32 %v154, %v156
    %v160 = vpack.c.bf16 %v158, %v158
    %v161 = vpack.c.bf16 %v159, %v159
    %vm162 = vcmask 257024
    %163 = vst.msk [vmem:[#allocation2] sm:$0xf] %vm162, %v160
    %164 = vst.msk [vmem:[#allocation2 + $0x4] sm:$0xf] %vm162, %v161
    %165 = vst.msk [vmem:[#allocation3] sm:$0xff] %vm73, 0.0
    %166 = vst.msk [vmem:[#allocation3 + $0x8] sm:$0xff] %vm73, 0.0
  $region53: #{transformer_encoder.7} parent=0 // pred_fallthru
    _
  %v167 = vld [vmem:[#allocation2] sm:$0xf]
  %v168 = vld [vmem:[#allocation2 + $0x4] sm:$0xf]
  %v169 = vld [vmem:[%s6] sm:$0xf]
  %v170 = vld [vmem:[%s6 + $0x4] sm:$0xf]
  %v171 = vld [vmem:[%s6 + $0x8] sm:$0xf]
  %v172 = vld [vmem:[%s6 + $0xc] sm:$0xf]
  %v173 = vld [vmem:[%s7] sm:$0x1]
  %v175 = vperm.slane %v173, 0
  %v179 = vunpack.c.l.b16 %v167
  %v180 = vunpack.c.l.b16 %v168
  %v181 = vpack.c.b16 %v180, %v179
  %v186 = vunpack.c.l.b16 %v169
  %v187 = vunpack.c.l.b16 %v170
  %v188 = vunpack.c.l.b16 %v171
  %v189 = vunpack.c.l.b16 %v172
  %v190 = vpack.c.b16 %v187, %v186
  %v191 = vpack.c.b16 %v189, %v188
  %vm194 = vcmask 261120
  %v196 = vsel %vm194, %v181, 0
  %198 = vmatpush.bf16.msra.mxu0 0
  %199 = vmatpush.bf16.msra.mxu0 0
  %200 = vmatpush.bf16.msra.mxu0 0
  %201 = vmatpush.bf16.msra.mxu0 0
  %202 = vmatpush.bf16.msra.mxu0 0
  %203 = vmatpush.bf16.msra.mxu0 0
  %204 = vmatpush.bf16.msra.mxu0 %v191
  %205 = vmatpush.bf16.msra.mxu0 %v190
  %206 = vmatmul.bf16.gmra.mxu0 %v196
  %v207 = vpop.f32.mrf.mxu0
  %v208 = vadd.f32 %v175, %v207
  %v209 = vpop.f32.mrf.mxu0
  %v210 = vadd.f32 %v175, %v209
  %211 = vdwg.mxu0
  %v212 = vmax.f32 %v208, 0.0
  %v213 = vmax.f32 %v210, 0.0
  %v214 = vld [vmem:[#allocation3] sm:$0xff]
  %v215 = vld [vmem:[#allocation3 + $0x8] sm:$0xff]
  %v216 = vpack.c.bf16 %v213, %v212
  %v217 = vld [vmem:[%s8] sm:$0xf]
  %v218 = vld [vmem:[%s8 + $0x4] sm:$0xf]
  %v219 = vld [vmem:[%s8 + $0x8] sm:$0xf]
  %v220 = vld [vmem:[%s8 + $0xc] sm:$0xf]
  %v221 = vld [vmem:[%s8 + $0x10] sm:$0xf]
  %v222 = vld [vmem:[%s8 + $0x14] sm:$0xf]
  %v223 = vld [vmem:[%s8 + $0x18] sm:$0xf]
  %v224 = vld [vmem:[%s8 + $0x1c] sm:$0xf]
  %v233 = vunpack.c.l.b16 %v217
  %v234 = vunpack.c.l.b16 %v218
  %v235 = vunpack.c.l.b16 %v219
  %v236 = vunpack.c.l.b16 %v220
  %v237 = vunpack.c.l.b16 %v221
  %v238 = vunpack.c.l.b16 %v222
  %v239 = vunpack.c.l.b16 %v223
  %v240 = vunpack.c.l.b16 %v224
  %v241 = vpack.c.b16 %v234, %v233
  %v242 = vpack.c.b16 %v236, %v235
  %v243 = vpack.c.b16 %v238, %v237
  %v244 = vpack.c.b16 %v240, %v239
  %vm249 = vcmask 523264
  %v251 = vsel %vm249, %v216, 0
  %253 = vmatpush.bf16.msra.mxu0 0
  %254 = vmatpush.bf16.msra.mxu0 0
  %255 = vmatpush.bf16.msra.mxu0 0
  %256 = vmatpush.bf16.msra.mxu0 0
  %257 = vmatpush.bf16.msra.mxu0 %v244
  %258 = vmatpush.bf16.msra.mxu0 %v243
  %259 = vmatpush.bf16.msra.mxu0 %v242
  %260 = vmatpush.bf16.msra.mxu0 %v241
  %261 = vmatmul.bf16.gmra.mxu0 %v251
  %v262 = vpop.f32.mrf.mxu0
  %v263 = vadd.f32 0.0, %v262
  %v264 = vpop.f32.mrf.mxu0
  %v265 = vadd.f32 0.0, %v264
  %266 = vdwg.mxu0
  %v267 = vadd.f32 %v214, %v263
  %v268 = vadd.f32 %v215, %v265
  %269 = vst.msk [vmem:[#allocation3] sm:$0xff] %vm194, %v267
  %270 = vst.msk [vmem:[#allocation3 + $0x8] sm:$0xff] %vm194, %v268
  // Predicated region
  $region54: #{transformer_encoder.7} parent=0 // pred_check
    %p271 = pneg %p42
  $region55: #{transformer_encoder.7} parent=0 // pred_check_branch
    %273 = sbr.rel (%p271) target = $region57
  $region56: #{transformer_encoder.7} parent=0 // pred_region
    %v274 = vld [vmem:[#allocation2] sm:$0xf]
    %v275 = vld [vmem:[#allocation2 + $0x4] sm:$0xf]
    %v276 = vunpack.c.l.bf16 %v274
    %v277 = vunpack.c.l.bf16 %v275
    %v278 = vld [vmem:[#allocation3] sm:$0xff]
    %v279 = vld [vmem:[#allocation3 + $0x8] sm:$0xff]
    %v280 = vadd.f32 %v276, %v278
    %v281 = vadd.f32 %v277, %v279
    %v282 = vld [vmem:[%s9] sm:$0x1]
    %v284 = vperm.slane %v282, 0
    %v286 = vadd.f32 %v280, %v284
    %v287 = vadd.f32 %v281, %v284
    %v288 = vld [vmem:[%s10] sm:$0x1]
    %v289 = vld [vmem:[%s11] sm:$0x1]
    %v290 = vsel %vm194, %v286, 0.0
    %291 = vadd.xlane.f32.xlu0 %v290
    %v292 = vpop.xlane.xlu0 %291
    %v293 = vsel %vm194, %v287, 0.0
    %294 = vadd.xlane.f32.xlu0 %v293
    %v295 = vpop.xlane.xlu0 %294
    %v296 = vrcp.pop 32.0
    %v297 = vmul.f32 32.0, %v296
    %v298 = vsub.f32 1.0, %v297
    %v299 = vmul.f32 %v296, %v298
    %v300 = vadd.f32 %v296, %v299
    %vm301 = vweird.f32 %v296
    %v302 = vsel %vm301, %v296, %v300
    %v303 = vmul.f32 %v292, %v302
    %v304 = vmul.f32 %v295, %v302
    %v305 = vsub.f32 %v286, %v303
    %v306 = vsub.f32 %v287, %v304
    %v307 = vmul.f32 %v305, %v305
    %v308 = vmul.f32 %v306, %v306
    %v309 = vsel %vm194, %v307, 0.0
    %310 = vadd.xlane.f32.xlu0 %v309
    %v311 = vpop.xlane.xlu0 %310
    %v312 = vsel %vm194, %v308, 0.0
    %313 = vadd.xlane.f32.xlu0 %v312
    %v314 = vpop.xlane.xlu0 %313
    %v315 = vmul.f32 %v311, %v302
    %v316 = vmul.f32 %v314, %v302
    %v317 = vadd.f32 %v315, 1e-05
    %v318 = vadd.f32 %v316, 1e-05
    %v319 = vrsqrt.pop %v317
    %v320 = vmul.f32 %v319, %v317
    %v321 = vmul.f32 %v320, %v319
    %v322 = vmul.f32 0.5, %v321
    %v323 = vsub.f32 1.5, %v322
    %v324 = vmul.f32 %v319, %v323
    %vm325 = vweird.f32 %v317
    %vm326 = vweird.f32 %v319
    %vm327 = vmor %vm325, %vm326
    %v328 = vsel %vm327, %v319, %v324
    %v329 = vrsqrt.pop %v318
    %v330 = vmul.f32 %v329, %v318
    %v331 = vmul.f32 %v330, %v329
    %v332 = vmul.f32 0.5, %v331
    %v333 = vsub.f32 1.5, %v332
    %v334 = vmul.f32 %v329, %v333
    %vm335 = vweird.f32 %v318
    %vm336 = vweird.f32 %v329
    %vm337 = vmor %vm335, %vm336
    %v338 = vsel %vm337, %v329, %v334
    %v339 = vmul.f32 %v305, %v328
    %v340 = vmul.f32 %v306, %v338
    %v342 = vperm.slane %v288, 0
    %v344 = vmul.f32 %v339, %v342
    %v345 = vmul.f32 %v340, %v342
    %v347 = vperm.slane %v289, 0
    %v349 = vadd.f32 %v344, %v347
    %v350 = vadd.f32 %v345, %v347
    %v351 = vpack.c.bf16 %v349, %v349
    %v352 = vpack.c.bf16 %v350, %v350
    %vm353 = vcmask 257024
    %354 = vst.msk [vmem:[%s12] sm:$0xf] %vm353, %v351
    %355 = vst.msk [vmem:[%s12 + $0x4] sm:$0xf] %vm353, %v352
  $region57: #{transformer_encoder.7} parent=0 // pred_fallthru
    _
  // Predicated region
  $region58: #{transformer_encoder.7} parent=0 // pred_check
    _
  $region59: #{transformer_encoder.7} parent=0 // pred_check_branch
    %357 = sbr.rel (0) target = $region61
  $region60: #{transformer_encoder.7} parent=0 // pred_region
    _
  $region61: #{transformer_encoder.7} parent=0 // pred_fallthru
    _
  // Predicated region
  $region62: #{transformer_encoder.7} parent=0 // pred_check
    _
  $region63: #{transformer_encoder.7} parent=0 // pred_check_branch
    %359 = sbr.rel (0) target = $region65
  $region64: #{transformer_encoder.7} parent=0 // pred_region
    _
  $region65: #{transformer_encoder.7} parent=0 // pred_fallthru
    _

// kernel: transformer_encoder.4
$region0: #{transformer_encoder.4}
  #allocation0 [shape = 'u32[]', space=smem, size = 0x4, offset = 0x4, fixed_abs, tag = 'smem constant byte address 0x4 - core index']
  #allocation1 [shape = 'u32[72,128]{1,0:T(1,128)}', space=vmem, size = 0x9000, scoped, tag = 'internal scratch']
  #allocation2 [shape = 'bf16[8,32]{1,0:T(8,128)(2,1)}', space=vmem, size = 0x800, scoped, tag = 'scratch operand']
  #allocation3 [shape = 'bf16[8,32]{1,0:T(8,128)(2,1)}', space=vmem, size = 0x800, scoped, tag = 'scratch operand']
  %s0 = inlined_call_operand.vmem [shape: bf16[2,8,32], index: 0, kind: input, shape index: {}]
  %s1 = inlined_call_operand.vmem [shape: bf16[1,32,96], index: 1, kind: input, shape index: {}]
  %s2 = inlined_call_operand.vmem [shape: f32[1,1,96], index: 2, kind: input, shape index: {}]
  %s3 = inlined_call_operand.vmem [shape: bf16[2,8,32], index: 3, kind: output, shape index: {}]
  %s4 = sld [smem:[#allocation0]]
  $region49: #{transformer_encoder.4} parent=0
    _
  %s6 = ssub.s32 1, %s4
  %s7 = scalar_select 0, %s6, %s4
  loop: start=0, step=1, limit=4
  $region2: #{transformer_encoder.4} parent=0 // loop_pre_header
    _
  $region3: #{transformer_encoder.4} parent=0 // loop_header
    %s9 = sphi 0, %s13
    %p10 = scmp.ge.s32.totalorder %s9, 4
    %s16 = sphi 0, %s35
    %s17 = sphi 0, %s31
    %s18 = sphi 0, %s27
    %s19 = sphi 0, %s16
    %s20 = sphi 0, %s17
    %s21 = sphi 0, %s18
    %s22 = sphi 0, %s19
    %s23 = sphi 0, %s20
    %s24 = sphi 0, %s21
    %s38 = sphi 0, %s40
    %s41 = sphi 0, %s38
    %s42 = sphi 0, %s41
    %s58 = sphi 0, %s42
    %s64 = sphi 0, %s66
    %s67 = sphi 0, %s64
    %s68 = sphi 0, %s67
    %s84 = sphi 0, %s68
    %s90 = sphi 0, %s92
    %s93 = sphi 0, %s90
    %s94 = sphi 0, %s93
    %s110 = sphi 0, %s94
    %s120 = sphi 0, %s122
    %s123 = sphi 0, %s120
    %s124 = sphi 0, %s123
    %s140 = sphi 0, %s124
  $region4: #{transformer_encoder.4} parent=0 // loop_header_branch
    %12 = sbr.rel (%p10) target = $region8
  $region5: #{transformer_encoder.4} parent=0 // loop_body
    %s14 = ssub.s32 %s9, 1
    %s15 = ssub.s32 %s9, 2
    %s25 = sadd.s32 1, %s18
    %p26 = scmp.ge.s32.totalorder %s25, 1
    %s27 = scalar_select %p26, 0, %s25
    %s28 = sadd.s32 1, %s17
    %s29 = scalar_select %p26, %s28, %s17
    %p30 = scmp.ge.s32.totalorder %s29, 1
    %s31 = scalar_select %p30, 0, %s29
    %s32 = sadd.s32 1, %s16
    %s33 = scalar_select %p30, %s32, %s16
    %p34 = scmp.ge.s32.totalorder %s33, 2
    %s35 = scalar_select %p34, 0, %s33
    %s36 = ssub.s32 %s16, %s35
    %p37 = scmp.eq.s32.totalorder %s36, 0
    %s39 = sadd.s32 %s38, 1
    %s40 = scalar_select %p37, %s38, %s39
    %p43 = pneg %p37
    %p44 = scmp.eq.s32.totalorder %s9, 1
    %p45 = por %p43, %p44
    %p46 = scmp.ne.s32.totalorder %s38, %s41
    %p47 = scmp.eq.s32.totalorder %s9, 0
    %p48 = por %p46, %p47
    %p49 = scmp.ne.s32.totalorder %s38, %s41
    %p50 = scmp.eq.s32.totalorder %s14, 1
    %p51 = por %p49, %p50
    %p52 = scmp.ne.s32.totalorder %s41, %s42
    %p53 = scmp.eq.s32.totalorder %s14, 0
    %p54 = por %p52, %p53
    %p55 = scmp.ne.s32.totalorder %s41, %s42
    %p56 = scmp.eq.s32.totalorder %s15, 1
    %p57 = por %p55, %p56
    %p59 = scmp.ne.s32.totalorder %s42, %s58
    %p60 = scmp.eq.s32.totalorder %s15, 0
    %p61 = por %p59, %p60
    %s62 = ssub.s32 %s17, %s31
    %p63 = scmp.eq.s32.totalorder %s62, 0
    %s65 = sadd.s32 %s64, 1
    %s66 = scalar_select %p63, %s64, %s65
    %p69 = pneg %p63
    %p70 = scmp.eq.s32.totalorder %s9, 1
    %p71 = por %p69, %p70
    %p72 = scmp.ne.s32.totalorder %s64, %s67
    %p73 = scmp.eq.s32.totalorder %s9, 0
    %p74 = por %p72, %p73
    %p75 = scmp.ne.s32.totalorder %s64, %s67
    %p76 = scmp.eq.s32.totalorder %s14, 1
    %p77 = por %p75, %p76
    %p78 = scmp.ne.s32.totalorder %s67, %s68
    %p79 = scmp.eq.s32.totalorder %s14, 0
    %p80 = por %p78, %p79
    %p81 = scmp.ne.s32.totalorder %s67, %s68
    %p82 = scmp.eq.s32.totalorder %s15, 1
    %p83 = por %p81, %p82
    %p85 = scmp.ne.s32.totalorder %s68, %s84
    %p86 = scmp.eq.s32.totalorder %s15, 0
    %p87 = por %p85, %p86
    %s88 = ssub.s32 %s17, %s31
    %p89 = scmp.eq.s32.totalorder %s88, 0
    %s91 = sadd.s32 %s90, 1
    %s92 = scalar_select %p89, %s90, %s91
    %p95 = pneg %p89
    %p96 = scmp.eq.s32.totalorder %s9, 1
    %p97 = por %p95, %p96
    %p98 = scmp.ne.s32.totalorder %s90, %s93
    %p99 = scmp.eq.s32.totalorder %s9, 0
    %p100 = por %p98, %p99
    %p101 = scmp.ne.s32.totalorder %s90, %s93
    %p102 = scmp.eq.s32.totalorder %s14, 1
    %p103 = por %p101, %p102
    %p104 = scmp.ne.s32.totalorder %s93, %s94
    %p105 = scmp.eq.s32.totalorder %s14, 0
    %p106 = por %p104, %p105
    %p107 = scmp.ne.s32.totalorder %s93, %s94
    %p108 = scmp.eq.s32.totalorder %s15, 1
    %p109 = por %p107, %p108
    %p111 = scmp.ne.s32.totalorder %s94, %s110
    %p112 = scmp.eq.s32.totalorder %s15, 0
    %p113 = por %p111, %p112
    %s114 = ssub.s32 %s16, %s35
    %s115 = ssub.s32 %s18, %s27
    %s116 = sor.u32 %s114, %s115
    %s117 = ssub.s32 %s17, %s31
    %s118 = sor.u32 %s116, %s117
    %p119 = scmp.eq.s32.totalorder %s118, 0
    %s121 = sadd.s32 %s120, 1
    %s122 = scalar_select %p119, %s120, %s121
    %p125 = pneg %p119
    %p126 = scmp.eq.s32.totalorder %s9, 1
    %p127 = por %p125, %p126
    %p128 = scmp.ne.s32.totalorder %s120, %s123
    %p129 = scmp.eq.s32.totalorder %s9, 0
    %p130 = por %p128, %p129
    %p131 = scmp.ne.s32.totalorder %s120, %s123
    %p132 = scmp.eq.s32.totalorder %s14, 1
    %p133 = por %p131, %p132
    %p134 = scmp.ne.s32.totalorder %s123, %s124
    %p135 = scmp.eq.s32.totalorder %s14, 0
    %p136 = por %p134, %p135
    %p137 = scmp.ne.s32.totalorder %s123, %s124
    %p138 = scmp.eq.s32.totalorder %s15, 1
    %p139 = por %p137, %p138
    %p141 = scmp.ne.s32.totalorder %s124, %s140
    %p142 = scmp.eq.s32.totalorder %s15, 0
    %p143 = por %p141, %p142
    %p144 = scmp.le.s32.totalorder 1, %s9
    %p145 = scmp.lt.s32.totalorder %s9, 3
    %p146 = pnand %p144, %p145
    %p147 = pneg %p146
    // Predicated region
    $region9: #{transformer_encoder.4} parent=5 // pred_check
      _
    $region10: #{transformer_encoder.4} parent=5 // pred_check_branch
      %149 = sbr.rel (%p146) target = $region12
    $region11: #{transformer_encoder.4} parent=5 // pred_region
      %s150 = ssub.s32 %s9, 1
      // Predicated region
      $region13: #{transformer_encoder.4} parent=11 // pred_check
        %p151 = pneg %p80
      $region14: #{transformer_encoder.4} parent=11 // pred_check_branch
        %153 = sbr.rel (%p151) target = $region16
      $region15: #{transformer_encoder.4} parent=11 // pred_region
        %p154 = scmp.lt.s32.totalorder %s20, 0
        %s155 = scalar_select %p154, %s20, 0
        %s156 = smul.addr %s155, 4
        %s157 = smul.addr %s156, 4
        %s158 = scalar_lea.vmem %s1, %s157
      $region16: #{transformer_encoder.4} parent=11 // pred_fallthru
        _
      // Predicated region
      $region17: #{transformer_encoder.4} parent=11 // pred_check
        %p159 = pneg %p106
      $region18: #{transformer_encoder.4} parent=11 // pred_check_branch
        %161 = sbr.rel (%p159) target = $region20
      $region19: #{transformer_encoder.4} parent=11 // pred_region
        %p162 = scmp.lt.s32.totalorder %s20, 0
        %s163 = scalar_select %p162, %s20, 0
        %s164 = scalar_lea.vmem %s2, %s163
      $region20: #{transformer_encoder.4} parent=11 // pred_fallthru
        _
    $region12: #{transformer_encoder.4} parent=5 // pred_fallthru
      _
    %p165 = scmp.lt.s32.totalorder %s9, 2
    // Predicated region
    $region21: #{transformer_encoder.4} parent=5 // pred_check
      %p166 = pneg %p165
    $region22: #{transformer_encoder.4} parent=5 // pred_check_branch
      %168 = sbr.rel (%p166) target = $region24
    $region23: #{transformer_encoder.4} parent=5 // pred_region
      // Predicated region
      $region25: #{transformer_encoder.4} parent=23 // pred_check
        %p169 = pneg %p48
      $region26: #{transformer_encoder.4} parent=23 // pred_check_branch
        %171 = sbr.rel (%p169) target = $region28
      $region27: #{transformer_encoder.4} parent=23 // pred_region
        %p172 = scmp.lt.s32.totalorder %s16, 1
        %s173 = scalar_select %p172, %s16, 1
        %s174 = smul.addr %s173, 4
        %s175 = scalar_lea.vmem %s0, %s174
      $region28: #{transformer_encoder.4} parent=23 // pred_fallthru
        _
    $region24: #{transformer_encoder.4} parent=5 // pred_fallthru
      _
    %p176 = scmp.le.s32.totalorder 1, %s9
    %p177 = scmp.lt.s32.totalorder %s9, 3
    %p178 = pnand %p176, %p177
    %p179 = pneg %p178
    // Predicated region
    $region29: #{transformer_encoder.4} parent=5 // pred_check
      _
    $region30: #{transformer_encoder.4} parent=5 // pred_check_branch
      %181 = sbr.rel (%p178) target = $region32
    $region31: #{transformer_encoder.4} parent=5 // pred_region
      %s182 = ssub.s32 %s9, 1
      %p183 = scmp.lt.s32.totalorder %s19, 1
      %s184 = scalar_select %p183, %s19, 1
      %s185 = smul.addr %s184, 4
      %s186 = scalar_lea.vmem %s0, %s185
      %p187 = pneg %p54
      %p188 = pneg %p51
      %p189 = scmp.lt.s32.totalorder %s20, 0
      %s190 = scalar_select %p189, %s20, 0
      %s191 = smul.addr %s190, 4
      %s192 = smul.addr %s191, 4
      %s193 = scalar_lea.vmem %s1, %s192
      %p194 = pneg %p80
      %p195 = pneg %p77
      %p196 = scmp.lt.s32.totalorder %s20, 0
      %s197 = scalar_select %p196, %s20, 0
      %s198 = scalar_lea.vmem %s2, %s197
      %p199 = pneg %p106
      %p200 = pneg %p103
      %p201 = pneg %p136
      %p202 = pneg %p133
      %p203 = scmp.lt.s32.totalorder %s19, 1
      %s204 = scalar_select %p203, %s19, 1
      %p205 = scmp.lt.s32.totalorder %s21, 0
      %s206 = scalar_select %p205, %s21, 0
      %p207 = scmp.lt.s32.totalorder %s20, 0
      %s208 = scalar_select %p207, %s20, 0
      %s209 = sadd.s32 %s208, %s206
      %s210 = sadd.s32 %s209, %s204
      %s211 = smul.addr %s210, 4
      %s212 = scalar_lea.vmem %s3, %s211
      %p213 = scmp.lt.s32.totalorder %s19, 1
      %s214 = scalar_select %p213, %s19, 1
      %s215 = smul.addr %s214, 4
      %s216 = scalar_lea.vmem %s0, %s215
      %p217 = scmp.lt.s32.totalorder %s20, 0
      %s218 = scalar_select %p217, %s20, 0
      %s219 = smul.addr %s218, 4
      %s220 = smul.addr %s219, 4
      %s221 = scalar_lea.vmem %s1, %s220
      %p222 = scmp.lt.s32.totalorder %s20, 0
      %s223 = scalar_select %p222, %s20, 0
      %s224 = scalar_lea.vmem %s2, %s223
      %p225 = scmp.lt.s32.totalorder %s19, 1
      %s226 = scalar_select %p225, %s19, 1
      %p227 = scmp.lt.s32.totalorder %s21, 0
      %s228 = scalar_select %p227, %s21, 0
      %p229 = scmp.lt.s32.totalorder %s20, 0
      %s230 = scalar_select %p229, %s20, 0
      %s231 = sadd.s32 %s230, %s228
      %s232 = sadd.s32 %s231, %s226
      %s233 = smul.addr %s232, 4
      %s234 = scalar_lea.vmem %s3, %s233
      %p236 = scmp.eq.s32.totalorder %s21, 0
      // Predicated region
      $region33: #{transformer_encoder.4} parent=31 // pred_check
        %p237 = pneg %p236
      $region34: #{transformer_encoder.4} parent=31 // pred_check_branch
        %239 = sbr.rel (%p237) target = $region36
      $region35: #{transformer_encoder.4} parent=31 // pred_region
        %v240 = vld [vmem:[%s216] sm:$0xf]
        %v241 = vld [vmem:[%s221] sm:$0xf]
        %v242 = vld [vmem:[%s221 + $0x4] sm:$0xf]
        %v243 = vld [vmem:[%s221 + $0x8] sm:$0xf]
        %v244 = vld [vmem:[%s221 + $0xc] sm:$0xf]
        %v245 = vld [vmem:[%s224] sm:$0x1]
        %v247 = vperm.slane %v245, 0
        %v252 = vunpack.c.l.b16 %v241
        %v253 = vunpack.c.l.b16 %v242
        %v254 = vunpack.c.l.b16 %v243
        %v255 = vunpack.c.l.b16 %v244
        %v256 = vpack.c.b16 %v253, %v252
        %v257 = vpack.c.b16 %v255, %v254
        %258 = vrot.lane.b32.xlu0 %v256, 96
        %v259 = vpop.permute.xlu0 %258
        %260 = vrot.lane.b32.xlu0 %v257, 96
        %v261 = vpop.permute.xlu0 %260
        %264 = vrot.lane.b32.xlu0 %v247, 96
        %v265 = vpop.permute.xlu0 %264
        %vm267 = vcmask 261120
        %v269 = vsel %vm267, %v240, 0
        %271 = vmatpush.bf16.msra.mxu0 0
        %272 = vmatpush.bf16.msra.mxu0 0
        %273 = vmatpush.bf16.msra.mxu0 0
        %274 = vmatpush.bf16.msra.mxu0 0
        %275 = vmatpush.bf16.msra.mxu0 0
        %276 = vmatpush.bf16.msra.mxu0 0
        %277 = vmatpush.bf16.msra.mxu0 %v261
        %278 = vmatpush.bf16.msra.mxu0 %v259
        %279 = vmatmul.bf16.gmra.mxu0 %v269
        %v280 = vpop.f32.mrf.mxu0
        %v281 = vadd.f32 %v265, %v280
        %v282 = vpop.f32.mrf.mxu0
        %283 = vdwg.mxu0
        %v284 = vpack.c.bf16 %v281, %v281
        %vm285 = vcmask 257024
        %286 = vst.msk [vmem:[#allocation2] sm:$0xf] %vm285, %v284
        %288 = vrot.lane.b32.xlu0 %v284, 96
        %v289 = vpop.permute.xlu0 %288
        %291 = vst.msk [vmem:[#allocation3] sm:$0xf] %vm285, %v289
      $region36: #{transformer_encoder.4} parent=31 // pred_fallthru
        _
      %s292 = smul.u32 %s21, 8
      %s293 = sshra.s32 %s292, 3
      %s294 = sand.u32 %s292, 7
      %s295 = smul.addr %s293, 4
      %s296 = scalar_lea.vmem %s216, %s295
      %v297 = vld [vmem:[%s296] sm:$0xf]
      %v298 = vld [vmem:[%s221] sm:$0xf]
      %v299 = vld [vmem:[%s221 + $0x4] sm:$0xf]
      %v300 = vld [vmem:[%s221 + $0x8] sm:$0xf]
      %v301 = vld [vmem:[%s221 + $0xc] sm:$0xf]
      %v302 = vld [vmem:[%s224] sm:$0x1]
      %v304 = vperm.slane %v302, 0
      %v310 = vunpack.c.l.b16 %v298
      %v311 = vunpack.c.l.b16 %v299
      %v312 = vunpack.c.l.b16 %v300
      %v313 = vunpack.c.l.b16 %v301
      %v314 = vpack.c.b16 %v311, %v310
      %v315 = vpack.c.b16 %v313, %v312
      %vm318 = vcmask 261120
      %v320 = vsel %vm318, %v297, 0
      %322 = vmatpush.bf16.msra.mxu0 0
      %323 = vmatpush.bf16.msra.mxu0 0
      %324 = vmatpush.bf16.msra.mxu0 0
      %325 = vmatpush.bf16.msra.mxu0 0
      %326 = vmatpush.bf16.msra.mxu0 0
      %327 = vmatpush.bf16.msra.mxu0 0
      %328 = vmatpush.bf16.msra.mxu0 %v315
      %329 = vmatpush.bf16.msra.mxu0 %v314
      %330 = vmatmul.bf16.gmra.mxu0 %v320
      %v331 = vpop.f32.mrf.mxu0
      %v332 = vadd.f32 %v304, %v331
      %v333 = vpop.f32.mrf.mxu0
      %334 = vdwg.mxu0
      %v335 = vmul.f32 %v332, 0.35355338
      %v336 = vpack.c.bf16 %v335, %v335
      %338 = vrot.lane.b32.xlu0 %v336, 120
      %v339 = vpop.permute.xlu0 %338
      %340 = vrot.lane.b32.xlu0 %v336, 112
      %v341 = vpop.permute.xlu0 %340
      %342 = vrot.lane.b32.xlu0 %v336, 104
      %v343 = vpop.permute.xlu0 %342
      %v344 = vld [vmem:[#allocation2] sm:$0xf]
      %346 = vrot.lane.b32.xlu0 %v344, 120
      %v347 = vpop.permute.xlu0 %346
      %349 = vrot.lane.b32.xlu0 %v344, 112
      %v350 = vpop.permute.xlu0 %349
      %352 = vrot.lane.b32.xlu0 %v344, 104
      %v353 = vpop.permute.xlu0 %352
      %v355 = vld [vmem:[#allocation3] sm:$0xf]
      %357 = vrot.lane.b32.xlu0 %v355, 120
      %v358 = vpop.permute.xlu0 %357
      %360 = vrot.lane.b32.xlu0 %v355, 112
      %v361 = vpop.permute.xlu0 %360
      %363 = vrot.lane.b32.xlu0 %v355, 104
      %v364 = vpop.permute.xlu0 %363
      %366 = vxpose.xlu0.c.b16.start [1/8] %v344, 128
      %367 = vxpose.xlu0.c.b16.cont [2/8] 0, 128
      %368 = vxpose.xlu0.c.b16.cont [3/8] 0, 128
      %369 = vxpose.xlu0.c.b16.cont [4/8] 0, 128
      %370 = vxpose.xlu0.c.b16.cont [5/8] 0, 128
      %371 = vxpose.xlu0.c.b16.cont [6/8] 0, 128
      %372 = vxpose.xlu0.c.b16.cont [7/8] 0, 128
      %373 = vxpose.xlu0.c.b16.end [8/8] 0, 128
      %v374 = vpop.trf.xlu0
      %v375 = vpop.trf.xlu0
      %v376 = vpop.trf.xlu0
      %v377 = vpop.trf.xlu0
      %v378 = vpop.trf.xlu0
      %v379 = vpop.trf.xlu0
      %v380 = vpop.trf.xlu0
      %v381 = vpop.trf.xlu0
      %382 = vxpose.xlu0.c.b16.start [1/8] %v347, 128
      %383 = vxpose.xlu0.c.b16.cont [2/8] 0, 128
      %384 = vxpose.xlu0.c.b16.cont [3/8] 0, 128
      %385 = vxpose.xlu0.c.b16.cont [4/8] 0, 128
      %386 = vxpose.xlu0.c.b16.cont [5/8] 0, 128
      %387 = vxpose.xlu0.c.b16.cont [6/8] 0, 128
      %388 = vxpose.xlu0.c.b16.cont [7/8] 0, 128
      %389 = vxpose.xlu0.c.b16.end [8/8] 0, 128
      %v390 = vpop.trf.xlu0
      %v391 = vpop.trf.xlu0
      %v392 = vpop.trf.xlu0
      %v393 = vpop.trf.xlu0
      %v394 = vpop.trf.xlu0
      %v395 = vpop.trf.xlu0
      %v396 = vpop.trf.xlu0
      %v397 = vpop.trf.xlu0
      %398 = vxpose.xlu0.c.b16.start [1/8] %v350, 128
      %399 = vxpose.xlu0.c.b16.cont [2/8] 0, 128
      %400 = vxpose.xlu0.c.b16.cont [3/8] 0, 128
      %401 = vxpose.xlu0.c.b16.cont [4/8] 0, 128
      %402 = vxpose.xlu0.c.b16.cont [5/8] 0, 128
      %403 = vxpose.xlu0.c.b16.cont [6/8] 0, 128
      %404 = vxpose.xlu0.c.b16.cont [7/8] 0, 128
      %405 = vxpose.xlu0.c.b16.end [8/8] 0, 128
      %v406 = vpop.trf.xlu0
      %v407 = vpop.trf.xlu0
      %v408 = vpop.trf.xlu0
      %v409 = vpop.trf.xlu0
      %v410 = vpop.trf.xlu0
      %v411 = vpop.trf.xlu0
      %v412 = vpop.trf.xlu0
      %v413 = vpop.trf.xlu0
      %414 = vxpose.xlu0.c.b16.start [1/8] %v353, 128
      %415 = vxpose.xlu0.c.b16.cont [2/8] 0, 128
      %416 = vxpose.xlu0.c.b16.cont [3/8] 0, 128
      %417 = vxpose.xlu0.c.b16.cont [4/8] 0, 128
      %418 = vxpose.xlu0.c.b16.cont [5/8] 0, 128
      %419 = vxpose.xlu0.c.b16.cont [6/8] 0, 128
      %420 = vxpose.xlu0.c.b16.cont [7/8] 0, 128
      %421 = vxpose.xlu0.c.b16.end [8/8] 0, 128
      %v422 = vpop.trf.xlu0
      %v423 = vpop.trf.xlu0
      %v424 = vpop.trf.xlu0
      %v425 = vpop.trf.xlu0
      %v426 = vpop.trf.xlu0
      %v427 = vpop.trf.xlu0
      %v428 = vpop.trf.xlu0
      %v429 = vpop.trf.xlu0
      %vm430 = vcmask 64512
      %v432 = vsel %vm430, %v336, 0
      %vm434 = vcmask 1043456
      %v436 = vsel %vm434, %v374, 0
      %438 = vmatpush.bf16.msra.mxu0 0
      %439 = vmatpush.bf16.msra.mxu0 0
      %440 = vmatpush.bf16.msra.mxu0 0
      %441 = vmatpush.bf16.msra.mxu0 0
      %442 = vmatpush.bf16.msra.mxu0 0
      %443 = vmatpush.bf16.msra.mxu0 0
      %444 = vmatpush.bf16.msra.mxu0 0
      %445 = vmatpush.bf16.msra.mxu0 %v436
      %446 = vmatmul.bf16.gmra.mxu0 %v432
      %v447 = vpop.f32.mrf.mxu0
      %v448 = vadd.f32 0.0, %v447
      %v449 = vpop.f32.mrf.mxu0
      %450 = vdwg.mxu0
      %v452 = vsel %vm430, %v339, 0
      %v455 = vsel %vm434, %v390, 0
      %457 = vmatpush.bf16.msra.mxu0 0
      %458 = vmatpush.bf16.msra.mxu0 0
      %459 = vmatpush.bf16.msra.mxu0 0
      %460 = vmatpush.bf16.msra.mxu0 0
      %461 = vmatpush.bf16.msra.mxu0 0
      %462 = vmatpush.bf16.msra.mxu0 0
      %463 = vmatpush.bf16.msra.mxu0 0
      %464 = vmatpush.bf16.msra.mxu0 %v455
      %465 = vmatmul.bf16.gmra.mxu0 %v452
      %v466 = vpop.f32.mrf.mxu0
      %v467 = vadd.f32 0.0, %v466
      %v468 = vpop.f32.mrf.mxu0
      %469 = vdwg.mxu0
      %v471 = vsel %vm430, %v341, 0
      %v474 = vsel %vm434, %v406, 0
      %476 = vmatpush.bf16.msra.mxu0 0
      %477 = vmatpush.bf16.msra.mxu0 0
      %478 = vmatpush.bf16.msra.mxu0 0
      %479 = vmatpush.bf16.msra.mxu0 0
      %480 = vmatpush.bf16.msra.mxu0 0
      %481 = vmatpush.bf16.msra.mxu0 0
      %482 = vmatpush.bf16.msra.mxu0 0
      %483 = vmatpush.bf16.msra.mxu0 %v474
      %484 = vmatmul.bf16.gmra.mxu0 %v471
      %v485 = vpop.f32.mrf.mxu0
      %v486 = vadd.f32 0.0, %v485
      %v487 = vpop.f32.mrf.mxu0
      %488 = vdwg.mxu0
      %v490 = vsel %vm430, %v343, 0
      %v493 = vsel %vm434, %v422, 0
      %495 = vmatpush.bf16.msra.mxu0 0
      %496 = vmatpush.bf16.msra.mxu0 0
      %497 = vmatpush.bf16.msra.mxu0 0
      %498 = vmatpush.bf16.msra.mxu0 0
      %499 = vmatpush.bf16.msra.mxu0 0
      %500 = vmatpush.bf16.msra.mxu0 0
      %501 = vmatpush.bf16.msra.mxu0 0
      %502 = vmatpush.bf16.msra.mxu0 %v493
      %503 = vmatmul.bf16.gmra.mxu0 %v490
      %v504 = vpop.f32.mrf.mxu0
      %v505 = vadd.f32 0.0, %v504
      %v506 = vpop.f32.mrf.mxu0
      %507 = vdwg.mxu0
      %v508 = vsel %vm430, %v448, -inf
      %509 = vmax.xlane.f32.xlu0 %v508
      %v510 = vpop.xlane.xlu0 %509
      %v511 = vsel %vm430, %v467, -inf
      %512 = vmax.xlane.f32.xlu0 %v511
      %v513 = vpop.xlane.xlu0 %512
      %v514 = vsel %vm430, %v486, -inf
      %515 = vmax.xlane.f32.xlu0 %v514
      %v516 = vpop.xlane.xlu0 %515
      %v517 = vsel %vm430, %v505, -inf
      %518 = vmax.xlane.f32.xlu0 %v517
      %v519 = vpop.xlane.xlu0 %518
      %v520 = vsub.f32 %v448, %v510
      %v521 = vsub.f32 %v467, %v513
      %v522 = vsub.f32 %v486, %v516
      %v523 = vsub.f32 %v505, %v519
      %v524 = vmul.f32 %v520, 1.442695
      %v525 = vpow.pop %v524
      %v526 = vmul.f32 %v521, 1.442695
      %v527 = vpow.pop %v526
      %v528 = vmul.f32 %v522, 1.442695
      %v529 = vpow.pop %v528
      %v530 = vmul.f32 %v523, 1.442695
      %v531 = vpow.pop %v530
      %v532 = vsel %vm430, %v525, 0.0
      %533 = vadd.xlane.f32.xlu0 %v532
      %v534 = vpop.xlane.xlu0 %533
      %v535 = vsel %vm430, %v527, 0.0
      %536 = vadd.xlane.f32.xlu0 %v535
      %v537 = vpop.xlane.xlu0 %536
      %v538 = vsel %vm430, %v529, 0.0
      %539 = vadd.xlane.f32.xlu0 %v538
      %v540 = vpop.xlane.xlu0 %539
      %v541 = vsel %vm430, %v531, 0.0
      %542 = vadd.xlane.f32.xlu0 %v541
      %v543 = vpop.xlane.xlu0 %542
      %v544 = vrcp.pop %v534
      %v545 = vrcp.pop %v537
      %v546 = vrcp.pop %v540
      %v547 = vrcp.pop %v543
      %v548 = vmul.f32 %v525, %v544
      %v549 = vmul.f32 %v527, %v545
      %v550 = vmul.f32 %v529, %v546
      %v551 = vmul.f32 %v531, %v547
      %v552 = vpack.c.bf16 %v548, %v548
      %v553 = vpack.c.bf16 %v549, %v549
      %v554 = vpack.c.bf16 %v550, %v550
      %v555 = vpack.c.bf16 %v551, %v551
      %556 = vxpose.xlu0.c.b16.start [1/8] %v355, 128
      %557 = vxpose.xlu0.c.b16.cont [2/8] 0, 128
      %558 = vxpose.xlu0.c.b16.cont [3/8] 0, 128
      %559 = vxpose.xlu0.c.b16.cont [4/8] 0, 128
      %560 = vxpose.xlu0.c.b16.cont [5/8] 0, 128
      %561 = vxpose.xlu0.c.b16.cont [6/8] 0, 128
      %562 = vxpose.xlu0.c.b16.cont [7/8] 0, 128
      %563 = vxpose.xlu0.c.b16.end [8/8] 0, 128
      %v564 = vpop.trf.xlu0
      %v565 = vpop.trf.xlu0
      %v566 = vpop.trf.xlu0
      %v567 = vpop.trf.xlu0
      %v568 = vpop.trf.xlu0
      %v569 = vpop.trf.xlu0
      %v570 = vpop.trf.xlu0
      %v571 = vpop.trf.xlu0
      %572 = vxpose.xlu0.c.b16.start [1/8] %v358, 128
      %573 = vxpose.xlu0.c.b16.cont [2/8] 0, 128
      %574 = vxpose.xlu0.c.b16.cont [3/8] 0, 128
      %575 = vxpose.xlu0.c.b16.cont [4/8] 0, 128
      %576 = vxpose.xlu0.c.b16.cont [5/8] 0, 128
      %577 = vxpose.xlu0.c.b16.cont [6/8] 0, 128
      %578 = vxpose.xlu0.c.b16.cont [7/8] 0, 128
      %579 = vxpose.xlu0.c.b16.end [8/8] 0, 128
      %v580 = vpop.trf.xlu0
      %v581 = vpop.trf.xlu0
      %v582 = vpop.trf.xlu0
      %v583 = vpop.trf.xlu0
      %v584 = vpop.trf.xlu0
      %v585 = vpop.trf.xlu0
      %v586 = vpop.trf.xlu0
      %v587 = vpop.trf.xlu0
      %588 = vxpose.xlu0.c.b16.start [1/8] %v361, 128
      %589 = vxpose.xlu0.c.b16.cont [2/8] 0, 128
      %590 = vxpose.xlu0.c.b16.cont [3/8] 0, 128
      %591 = vxpose.xlu0.c.b16.cont [4/8] 0, 128
      %592 = vxpose.xlu0.c.b16.cont [5/8] 0, 128
      %593 = vxpose.xlu0.c.b16.cont [6/8] 0, 128
      %594 = vxpose.xlu0.c.b16.cont [7/8] 0, 128
      %595 = vxpose.xlu0.c.b16.end [8/8] 0, 128
      %v596 = vpop.trf.xlu0
      %v597 = vpop.trf.xlu0
      %v598 = vpop.trf.xlu0
      %v599 = vpop.trf.xlu0
      %v600 = vpop.trf.xlu0
      %v601 = vpop.trf.xlu0
      %v602 = vpop.trf.xlu0
      %v603 = vpop.trf.xlu0
      %604 = vxpose.xlu0.c.b16.start [1/8] %v364, 128
      %605 = vxpose.xlu0.c.b16.cont [2/8] 0, 128
      %606 = vxpose.xlu0.c.b16.cont [3/8] 0, 128
      %607 = vxpose.xlu0.c.b16.cont [4/8] 0, 128
      %608 = vxpose.xlu0.c.b16.cont [5/8] 0, 128
      %609 = vxpose.xlu0.c.b16.cont [6/8] 0, 128
      %610 = vxpose.xlu0.c.b16.cont [7/8] 0, 128
      %611 = vxpose.xlu0.c.b16.end [8/8] 0, 128
      %v612 = vpop.trf.xlu0
      %v613 = vpop.trf.xlu0
      %v614 = vpop.trf.xlu0
      %v615 = vpop.trf.xlu0
      %v616 = vpop.trf.xlu0
      %v617 = vpop.trf.xlu0
      %v618 = vpop.trf.xlu0
      %v619 = vpop.trf.xlu0
      %v621 = vsel %vm430, %v564, 0
      %v624 = vsel %vm430, %v552, 0
      %626 = vmatpush.bf16.xpose.msra.mxu0 0
      %627 = vmatpush.bf16.xpose.msra.mxu0 0
      %628 = vmatpush.bf16.xpose.msra.mxu0 0
      %629 = vmatpush.bf16.xpose.msra.mxu0 0
      %630 = vmatpush.bf16.xpose.msra.mxu0 0
      %631 = vmatpush.bf16.xpose.msra.mxu0 0
      %632 = vmatpush.bf16.xpose.msra.mxu0 0
      %633 = vmatpush.bf16.xpose.msra.mxu0 %v624
      %634 = vmatmul.bf16.gmra.mxu0 %v621
      %v635 = vpop.f32.mrf.mxu0
      %v636 = vadd.f32 0.0, %v635
      %v637 = vpop.f32.mrf.mxu0
      %638 = vdwg.mxu0
      %v640 = vsel %vm430, %v580, 0
      %v643 = vsel %vm430, %v553, 0
      %645 = vmatpush.bf16.xpose.msra.mxu0 0
      %646 = vmatpush.bf16.xpose.msra.mxu0 0
      %647 = vmatpush.bf16.xpose.msra.mxu0 0
      %648 = vmatpush.bf16.xpose.msra.mxu0 0
      %649 = vmatpush.bf16.xpose.msra.mxu0 0
      %650 = vmatpush.bf16.xpose.msra.mxu0 0
      %651 = vmatpush.bf16.xpose.msra.mxu0 0
      %652 = vmatpush.bf16.xpose.msra.mxu0 %v643
      %653 = vmatmul.bf16.gmra.mxu0 %v640
      %v654 = vpop.f32.mrf.mxu0
      %v655 = vadd.f32 0.0, %v654
      %v656 = vpop.f32.mrf.mxu0
      %657 = vdwg.mxu0
      %v659 = vsel %vm430, %v596, 0
      %v662 = vsel %vm430, %v554, 0
      %664 = vmatpush.bf16.xpose.msra.mxu0 0
      %665 = vmatpush.bf16.xpose.msra.mxu0 0
      %666 = vmatpush.bf16.xpose.msra.mxu0 0
      %667 = vmatpush.bf16.xpose.msra.mxu0 0
      %668 = vmatpush.bf16.xpose.msra.mxu0 0
      %669 = vmatpush.bf16.xpose.msra.mxu0 0
      %670 = vmatpush.bf16.xpose.msra.mxu0 0
      %671 = vmatpush.bf16.xpose.msra.mxu0 %v662
      %672 = vmatmul.bf16.gmra.mxu0 %v659
      %v673 = vpop.f32.mrf.mxu0
      %v674 = vadd.f32 0.0, %v673
      %v675 = vpop.f32.mrf.mxu0
      %676 = vdwg.mxu0
      %v678 = vsel %vm430, %v612, 0
      %v681 = vsel %vm430, %v555, 0
      %683 = vmatpush.bf16.xpose.msra.mxu0 0
      %684 = vmatpush.bf16.xpose.msra.mxu0 0
      %685 = vmatpush.bf16.xpose.msra.mxu0 0
      %686 = vmatpush.bf16.xpose.msra.mxu0 0
      %687 = vmatpush.bf16.xpose.msra.mxu0 0
      %688 = vmatpush.bf16.xpose.msra.mxu0 0
      %689 = vmatpush.bf16.xpose.msra.mxu0 0
      %690 = vmatpush.bf16.xpose.msra.mxu0 %v681
      %691 = vmatmul.bf16.gmra.mxu0 %v678
      %v692 = vpop.f32.mrf.mxu0
      %v693 = vadd.f32 0.0, %v692
      %v694 = vpop.f32.mrf.mxu0
      %695 = vdwg.mxu0
      %696 = vxpose.xlu0.b32.start [1/16] %v636, 128
      %697 = vxpose.xlu0.b32.cont [2/16] 0.0, 128
      %698 = vxpose.xlu0.b32.cont [3/16] 0.0, 128
      %699 = vxpose.xlu0.b32.cont [4/16] 0.0, 128
      %700 = vxpose.xlu0.b32.cont [5/16] 0.0, 128
      %701 = vxpose.xlu0.b32.cont [6/16] 0.0, 128
      %702 = vxpose.xlu0.b32.cont [7/16] 0.0, 128
      %703 = vxpose.xlu0.b32.cont [8/16] 0.0, 128
      %704 = vxpose.xlu0.b32.cont [9/16] 0.0, 128
      %705 = vxpose.xlu0.b32.cont [10/16] 0.0, 128
      %706 = vxpose.xlu0.b32.cont [11/16] 0.0, 128
      %707 = vxpose.xlu0.b32.cont [12/16] 0.0, 128
      %708 = vxpose.xlu0.b32.cont [13/16] 0.0, 128
      %709 = vxpose.xlu0.b32.cont [14/16] 0.0, 128
      %710 = vxpose.xlu0.b32.cont [15/16] 0.0, 128
      %711 = vxpose.xlu0.b32.end [16/16] 0.0, 128
      %v712 = vpop.trf.xlu0
      %v713 = vpop.trf.xlu0
      %v714 = vpop.trf.xlu0
      %v715 = vpop.trf.xlu0
      %v716 = vpop.trf.xlu0
      %v717 = vpop.trf.xlu0
      %v718 = vpop.trf.xlu0
      %v719 = vpop.trf.xlu0
      %v720 = vpop.trf.xlu0
      %v721 = vpop.trf.xlu0
      %v722 = vpop.trf.xlu0
      %v723 = vpop.trf.xlu0
      %v724 = vpop.trf.xlu0
      %v725 = vpop.trf.xlu0
      %v726 = vpop.trf.xlu0
      %v727 = vpop.trf.xlu0
      %728 = vxpose.xlu0.b32.start [1/16] %v655, 128
      %729 = vxpose.xlu0.b32.cont [2/16] 0.0, 128
      %730 = vxpose.xlu0.b32.cont [3/16] 0.0, 128
      %731 = vxpose.xlu0.b32.cont [4/16] 0.0, 128
      %732 = vxpose.xlu0.b32.cont [5/16] 0.0, 128
      %733 = vxpose.xlu0.b32.cont [6/16] 0.0, 128
      %734 = vxpose.xlu0.b32.cont [7/16] 0.0, 128
      %735 = vxpose.xlu0.b32.cont [8/16] 0.0, 128
      %736 = vxpose.xlu0.b32.cont [9/16] 0.0, 128
      %737 = vxpose.xlu0.b32.cont [10/16] 0.0, 128
      %738 = vxpose.xlu0.b32.cont [11/16] 0.0, 128
      %739 = vxpose.xlu0.b32.cont [12/16] 0.0, 128
      %740 = vxpose.xlu0.b32.cont [13/16] 0.0, 128
      %741 = vxpose.xlu0.b32.cont [14/16] 0.0, 128
      %742 = vxpose.xlu0.b32.cont [15/16] 0.0, 128
      %743 = vxpose.xlu0.b32.end [16/16] 0.0, 128
      %v744 = vpop.trf.xlu0
      %v745 = vpop.trf.xlu0
      %v746 = vpop.trf.xlu0
      %v747 = vpop.trf.xlu0
      %v748 = vpop.trf.xlu0
      %v749 = vpop.trf.xlu0
      %v750 = vpop.trf.xlu0
      %v751 = vpop.trf.xlu0
      %v752 = vpop.trf.xlu0
      %v753 = vpop.trf.xlu0
      %v754 = vpop.trf.xlu0
      %v755 = vpop.trf.xlu0
      %v756 = vpop.trf.xlu0
      %v757 = vpop.trf.xlu0
      %v758 = vpop.trf.xlu0
      %v759 = vpop.trf.xlu0
      %760 = vxpose.xlu0.b32.start [1/16] %v674, 128
      %761 = vxpose.xlu0.b32.cont [2/16] 0.0, 128
      %762 = vxpose.xlu0.b32.cont [3/16] 0.0, 128
      %763 = vxpose.xlu0.b32.cont [4/16] 0.0, 128
      %764 = vxpose.xlu0.b32.cont [5/16] 0.0, 128
      %765 = vxpose.xlu0.b32.cont [6/16] 0.0, 128
      %766 = vxpose.xlu0.b32.cont [7/16] 0.0, 128
      %767 = vxpose.xlu0.b32.cont [8/16] 0.0, 128
      %768 = vxpose.xlu0.b32.cont [9/16] 0.0, 128
      %769 = vxpose.xlu0.b32.cont [10/16] 0.0, 128
      %770 = vxpose.xlu0.b32.cont [11/16] 0.0, 128
      %771 = vxpose.xlu0.b32.cont [12/16] 0.0, 128
      %772 = vxpose.xlu0.b32.cont [13/16] 0.0, 128
      %773 = vxpose.xlu0.b32.cont [14/16] 0.0, 128
      %774 = vxpose.xlu0.b32.cont [15/16] 0.0, 128
      %775 = vxpose.xlu0.b32.end [16/16] 0.0, 128
      %v776 = vpop.trf.xlu0
      %v777 = vpop.trf.xlu0
      %v778 = vpop.trf.xlu0
      %v779 = vpop.trf.xlu0
      %v780 = vpop.trf.xlu0
      %v781 = vpop.trf.xlu0
      %v782 = vpop.trf.xlu0
      %v783 = vpop.trf.xlu0
      %v784 = vpop.trf.xlu0
      %v785 = vpop.trf.xlu0
      %v786 = vpop.trf.xlu0
      %v787 = vpop.trf.xlu0
      %v788 = vpop.trf.xlu0
      %v789 = vpop.trf.xlu0
      %v790 = vpop.trf.xlu0
      %v791 = vpop.trf.xlu0
      %792 = vxpose.xlu0.b32.start [1/16] %v693, 128
      %793 = vxpose.xlu0.b32.cont [2/16] 0.0, 128
      %794 = vxpose.xlu0.b32.cont [3/16] 0.0, 128
      %795 = vxpose.xlu0.b32.cont [4/16] 0.0, 128
      %796 = vxpose.xlu0.b32.cont [5/16] 0.0, 128
      %797 = vxpose.xlu0.b32.cont [6/16] 0.0, 128
      %798 = vxpose.xlu0.b32.cont [7/16] 0.0, 128
      %799 = vxpose.xlu0.b32.cont [8/16] 0.0, 128
      %800 = vxpose.xlu0.b32.cont [9/16] 0.0, 128
      %801 = vxpose.xlu0.b32.cont [10/16] 0.0, 128
      %802 = vxpose.xlu0.b32.cont [11/16] 0.0, 128
      %803 = vxpose.xlu0.b32.cont [12/16] 0.0, 128
      %804 = vxpose.xlu0.b32.cont [13/16] 0.0, 128
      %805 = vxpose.xlu0.b32.cont [14/16] 0.0, 128
      %806 = vxpose.xlu0.b32.cont [15/16] 0.0, 128
      %807 = vxpose.xlu0.b32.end [16/16] 0.0, 128
      %v808 = vpop.trf.xlu0
      %v809 = vpop.trf.xlu0
      %v810 = vpop.trf.xlu0
      %v811 = vpop.trf.xlu0
      %v812 = vpop.trf.xlu0
      %v813 = vpop.trf.xlu0
      %v814 = vpop.trf.xlu0
      %v815 = vpop.trf.xlu0
      %v816 = vpop.trf.xlu0
      %v817 = vpop.trf.xlu0
      %v818 = vpop.trf.xlu0
      %v819 = vpop.trf.xlu0
      %v820 = vpop.trf.xlu0
      %v821 = vpop.trf.xlu0
      %v822 = vpop.trf.xlu0
      %v823 = vpop.trf.xlu0
      %v824 = vrot.slane %v776, 4
      %vm825 = vcmask 1047556
      %v826 = vsel %vm825, %v824, %v712
      %v827 = vrot.slane %v712, 4
      %v828 = vsel %vm825, %v776, %v827
      %v830 = vunpack.c.l.s4 1983009808
      %v831 = vunpack.c.0.s8 %v830
      %v832 = vperm.slane %v826, %v831
      %v834 = vunpack.c.l.s4 1983009808
      %v835 = vunpack.c.0.s8 %v834
      %v836 = vperm.slane %v828, %v835
      %v837 = vrot.slane %v808, 4
      %v838 = vsel %vm825, %v837, %v744
      %v839 = vrot.slane %v744, 4
      %v840 = vsel %vm825, %v808, %v839
      %v842 = vunpack.c.l.s4 1983009808
      %v843 = vunpack.c.0.s8 %v842
      %v844 = vperm.slane %v838, %v843
      %v846 = vunpack.c.l.s4 1983009808
      %v847 = vunpack.c.0.s8 %v846
      %v848 = vperm.slane %v840, %v847
      %v849 = vrot.slane %v844, 4
      %v850 = vsel %vm825, %v849, %v832
      %v851 = vrot.slane %v832, 4
      %v852 = vsel %vm825, %v844, %v851
      %v854 = vunpack.c.l.s4 1934713408
      %v855 = vunpack.c.0.s8 %v854
      %v856 = vperm.slane %v850, %v855
      %v858 = vunpack.c.l.s4 1934713408
      %v859 = vunpack.c.0.s8 %v858
      %v860 = vperm.slane %v852, %v859
      %v861 = vrot.slane %v848, 4
      %v862 = vsel %vm825, %v861, %v836
      %v863 = vrot.slane %v836, 4
      %v864 = vsel %vm825, %v848, %v863
      %v866 = vunpack.c.l.s4 1934713408
      %v867 = vunpack.c.0.s8 %v866
      %v868 = vperm.slane %v862, %v867
      %v870 = vunpack.c.l.s4 1934713408
      %v871 = vunpack.c.0.s8 %v870
      %v872 = vperm.slane %v864, %v871
      %v873 = vrot.slane %v856, 4
      %v874 = vsel %vm825, 0.0, %v873
      %v875 = vrot.slane %v860, 4
      %v876 = vsel %vm825, 0.0, %v875
      %v877 = vrot.slane %v868, 4
      %v878 = vsel %vm825, 0.0, %v877
      %v879 = vrot.slane %v872, 4
      %v880 = vsel %vm825, 0.0, %v879
      %v881 = vsel %vm825, %v875, %v856
      %v883 = vunpack.c.l.s4 1983009808
      %v884 = vunpack.c.0.s8 %v883
      %v885 = vperm.slane %v881, %v884
      %v886 = vrot.slane %v876, 4
      %v887 = vsel %vm825, %v886, %v874
      %v889 = vunpack.c.l.s4 1983009808
      %v890 = vunpack.c.0.s8 %v889
      %v891 = vperm.slane %v887, %v890
      %v892 = vsel %vm825, %v879, %v868
      %v894 = vunpack.c.l.s4 1983009808
      %v895 = vunpack.c.0.s8 %v894
      %v896 = vperm.slane %v892, %v895
      %v897 = vrot.slane %v880, 4
      %v898 = vsel %vm825, %v897, %v878
      %v900 = vunpack.c.l.s4 1983009808
      %v901 = vunpack.c.0.s8 %v900
      %v902 = vperm.slane %v898, %v901
      %v903 = vrot.slane %v891, 4
      %v904 = vsel %vm825, %v903, %v885
      %v905 = vrot.slane %v885, 4
      %v906 = vsel %vm825, %v891, %v905
      %v908 = vunpack.c.l.s4 1934713408
      %v909 = vunpack.c.0.s8 %v908
      %v910 = vperm.slane %v904, %v909
      %v912 = vunpack.c.l.s4 1934713408
      %v913 = vunpack.c.0.s8 %v912
      %v914 = vperm.slane %v906, %v913
      %v915 = vrot.slane %v902, 4
      %v916 = vsel %vm825, %v915, %v896
      %v917 = vrot.slane %v896, 4
      %v918 = vsel %vm825, %v902, %v917
      %v920 = vunpack.c.l.s4 1934713408
      %v921 = vunpack.c.0.s8 %v920
      %v922 = vperm.slane %v916, %v921
      %v924 = vunpack.c.l.s4 1934713408
      %v925 = vunpack.c.0.s8 %v924
      %v926 = vperm.slane %v918, %v925
      %v927 = vrot.slane %v922, 4
      %v928 = vsel %vm825, %v927, %v910
      %v929 = vrot.slane %v910, 4
      %v930 = vsel %vm825, %v922, %v929
      %v931 = vrot.slane %v926, 4
      %v932 = vsel %vm825, %v931, %v914
      %v933 = vrot.slane %v914, 4
      %v934 = vsel %vm825, %v926, %v933
      %936 = vrot.lane.b32.xlu0 %v930, 8
      %v937 = vpop.permute.xlu0 %936
      %940 = vrot.lane.b32.xlu0 %v932, 16
      %v941 = vpop.permute.xlu0 %940
      %944 = vrot.lane.b32.xlu0 %v934, 24
      %v945 = vpop.permute.xlu0 %944
      %v947 = vsel %vm430, %v928, %v937
      %vm948 = vcmask 130048
      %v949 = vsel %vm948, %v947, %v941
      %vm950 = vcmask 195584
      %v951 = vsel %vm950, %v949, %v945
      %v952 = vpack.c.bf16 %v951, %v951
      %vm953 = vcmask 257024
      %954 = vst.msk [vmem:[%s234] sm:$0xf] %vm953, %v952
      %p955 = scmp.lt.s32.totalorder %s19, 1
      %s956 = scalar_select %p955, %s19, 1
      %p957 = scmp.lt.s32.totalorder %s21, 0
      %s958 = scalar_select %p957, %s21, 0
      %p959 = scmp.lt.s32.totalorder %s20, 0
      %s960 = scalar_select %p959, %s20, 0
      %s961 = sadd.s32 %s960, %s958
      %s962 = sadd.s32 %s961, %s956
      %s963 = smul.addr %s962, 4
      %s964 = scalar_lea.vmem %s3, %s963
      // Predicated region
      $region37: #{transformer_encoder.4} parent=31 // pred_check
        %p965 = pneg %p133
      $region38: #{transformer_encoder.4} parent=31 // pred_check_branch
        %967 = sbr.rel (%p965) target = $region40
      $region39: #{transformer_encoder.4} parent=31 // pred_region
        _
      $region40: #{transformer_encoder.4} parent=31 // pred_fallthru
        _
    $region32: #{transformer_encoder.4} parent=5 // pred_fallthru
      _
    %p968 = scmp.le.s32.totalorder 2, %s9
    // Predicated region
    $region41: #{transformer_encoder.4} parent=5 // pred_check
      %p969 = pneg %p968
    $region42: #{transformer_encoder.4} parent=5 // pred_check_branch
      %971 = sbr.rel (%p969) target = $region44
    $region43: #{transformer_encoder.4} parent=5 // pred_region
      %s972 = ssub.s32 %s9, 2
      // Predicated region
      $region45: #{transformer_encoder.4} parent=43 // pred_check
        %p973 = pneg %p139
      $region46: #{transformer_encoder.4} parent=43 // pred_check_branch
        %975 = sbr.rel (%p973) target = $region48
      $region47: #{transformer_encoder.4} parent=43 // pred_region
        %p976 = scmp.lt.s32.totalorder %s22, 1
        %s977 = scalar_select %p976, %s22, 1
        %p978 = scmp.lt.s32.totalorder %s24, 0
        %s979 = scalar_select %p978, %s24, 0
        %p980 = scmp.lt.s32.totalorder %s23, 0
        %s981 = scalar_select %p980, %s23, 0
        %s982 = sadd.s32 %s981, %s979
        %s983 = sadd.s32 %s982, %s977
        %s984 = smul.addr %s983, 4
        %s985 = scalar_lea.vmem %s3, %s984
      $region48: #{transformer_encoder.4} parent=43 // pred_fallthru
        _
    $region44: #{transformer_encoder.4} parent=5 // pred_fallthru
      _
  $region6: #{transformer_encoder.4} parent=0 // loop_footer
    %s13 = sadd.s32 1, %s9
  $region7: #{transformer_encoder.4} parent=0 // loop_footer_branch
    %8 = sbr.rel target = $region3
  $region8: #{transformer_encoder.4} parent=0 // loop_exit
    _

// kernel: transformer_encoder.5
$region0: #{transformer_encoder.5}
  #allocation0 [shape = 'u32[]', space=smem, size = 0x4, offset = 0x4, fixed_abs, tag = 'smem constant byte address 0x4 - core index']
  #allocation1 [shape = 'u32[72,128]{1,0:T(1,128)}', space=vmem, size = 0x9000, scoped, tag = 'internal scratch']
  #allocation2 [shape = 'bf16[16,32]{1,0:T(8,128)(2,1)}', space=vmem, size = 0x1000, scoped, tag = 'scratch operand']
  #allocation3 [shape = 'f32[16,32]{1,0:T(8,128)}', space=vmem, size = 0x2000, scoped, tag = 'scratch operand']
  %s0 = inlined_call_operand.vmem [shape: bf16[16,32], index: 0, kind: input, shape index: {}, may-alias: {0,12}]
  %s1 = inlined_call_operand.vmem [shape: bf16[16,32], index: 1, kind: input, shape index: {}]
  %s2 = inlined_call_operand.vmem [shape: bf16[32,32], index: 2, kind: input, shape index: {}]
  %s3 = inlined_call_operand.vmem [shape: f32[1,32], index: 3, kind: input, shape index: {}]
  %s4 = inlined_call_operand.vmem [shape: f32[1,32], index: 4, kind: input, shape index: {}]
  %s5 = inlined_call_operand.hbm [shape: f32[1,32], index: 5, kind: input, shape index: {}]
  %s6 = inlined_call_operand.vmem [shape: bf16[32,64], index: 6, kind: input, shape index: {}]
  %s7 = inlined_call_operand.hbm [shape: f32[1,64], index: 7, kind: input, shape index: {}]
  %s8 = inlined_call_operand.vmem [shape: bf16[64,32], index: 8, kind: input, shape index: {}]
  %s9 = inlined_call_operand.hbm [shape: f32[1,32], index: 9, kind: input, shape index: {}]
  %s10 = inlined_call_operand.vmem [shape: f32[1,32], index: 10, kind: input, shape index: {}]
  %s11 = inlined_call_operand.hbm [shape: f32[1,32], index: 11, kind: input, shape index: {}]
  %s12 = inlined_call_operand.vmem [shape: bf16[16,32], index: 12, kind: output, shape index: {}, may-alias: {0,12}]
  %s13 = sld [smem:[#allocation0]]
  $region82: #{transformer_encoder.5} parent=0
    _
  %s15 = ssub.s32 1, %s13
  %s16 = scalar_select 0, %s15, %s13
  $region1: #{transformer_encoder.5} parent=0
    #allocation4 [shape = 'u8[512]{0}', space=vmem, size = 0x400, scoped, tag = 'input window, operand 5, single buffered']
    #allocation5 [shape = 's32[1]{0}', space=sflag, size = 0x4, scoped, tag = 'scoped memory for transformer_encoder.5']
    #allocation6 [shape = 'u8[512]{0}', space=vmem, size = 0x400, scoped, tag = 'input window, operand 7, single buffered']
    #allocation7 [shape = 's32[1]{0}', space=sflag, size = 0x4, scoped, tag = 'scoped memory for transformer_encoder.5']
    #allocation8 [shape = 'u8[512]{0}', space=vmem, size = 0x400, scoped, tag = 'input window, operand 9, single buffered']
    #allocation9 [shape = 'u8[512]{0}', space=vmem, size = 0x400, scoped, tag = 'input window, operand 11, single buffered']
    #allocation10 [shape = 's32[1]{0}', space=sflag, size = 0x4, scoped, tag = 'scoped memory for transformer_encoder.5']
    %17 = vsyncpa [#allocation5], 0
    %18 = vsyncpa [#allocation7], 0
    %19 = vsyncpa [#allocation10], 0
    // Predicated region
    $region2: #{transformer_encoder.5} parent=1 // pred_check
      _
    $region3: #{transformer_encoder.5} parent=1 // pred_check_branch
      %21 = sbr.rel (0) target = $region5
    $region4: #{transformer_encoder.5} parent=1 // pred_region
      _
    $region5: #{transformer_encoder.5} parent=1 // pred_fallthru
      _
    // Predicated region
    $region6: #{transformer_encoder.5} parent=1 // pred_check
      _
    $region7: #{transformer_encoder.5} parent=1 // pred_check_branch
      %23 = sbr.rel (0) target = $region9
    $region8: #{transformer_encoder.5} parent=1 // pred_region
      _
    $region9: #{transformer_encoder.5} parent=1 // pred_fallthru
      _
    // Predicated region
    $region10: #{transformer_encoder.5} parent=1 // pred_check
      _
    $region11: #{transformer_encoder.5} parent=1 // pred_check_branch
      %25 = sbr.rel (0) target = $region13
    $region12: #{transformer_encoder.5} parent=1 // pred_region
      _
    $region13: #{transformer_encoder.5} parent=1 // pred_fallthru
      _
    // Predicated region
    $region14: #{transformer_encoder.5} parent=1 // pred_check
      _
    $region15: #{transformer_encoder.5} parent=1 // pred_check_branch
      %27 = sbr.rel (0) target = $region17
    $region16: #{transformer_encoder.5} parent=1 // pred_region
      _
    $region17: #{transformer_encoder.5} parent=1 // pred_fallthru
      _
    // Predicated region
    $region18: #{transformer_encoder.5} parent=1 // pred_check
      _
    $region19: #{transformer_encoder.5} parent=1 // pred_check_branch
      %29 = sbr.rel (0) target = $region21
    $region20: #{transformer_encoder.5} parent=1 // pred_region
      _
    $region21: #{transformer_encoder.5} parent=1 // pred_fallthru
      _
    // Predicated region
    $region22: #{transformer_encoder.5} parent=1 // pred_check
      _
    $region23: #{transformer_encoder.5} parent=1 // pred_check_branch
      %31 = sbr.rel (0) target = $region25
    $region24: #{transformer_encoder.5} parent=1 // pred_region
      %33 = vsyncadd [#allocation5], 0
      %s35 = sshll.u32 %s5, 4
      %s36 = int_to_ptr.hbm [resolvable:$true] %s35
      %s37 = sshll.u32 [#allocation4], 4
      %s38 = int_to_ptr.vmem [resolvable:$true] %s37
      %40 = dma.hbm_to_vmem [thread:$0]  %s36, 16, %s38, [#allocation5]
    $region25: #{transformer_encoder.5} parent=1 // pred_fallthru
      _
    // Predicated region
    $region26: #{transformer_encoder.5} parent=1 // pred_check
      _
    $region27: #{transformer_encoder.5} parent=1 // pred_check_branch
      %42 = sbr.rel (0) target = $region29
    $region28: #{transformer_encoder.5} parent=1 // pred_region
      _
    $region29: #{transformer_encoder.5} parent=1 // pred_fallthru
      _
    // Predicated region
    $region30: #{transformer_encoder.5} parent=1 // pred_check
      _
    $region31: #{transformer_encoder.5} parent=1 // pred_check_branch
      %44 = sbr.rel (0) target = $region33
    $region32: #{transformer_encoder.5} parent=1 // pred_region
      %46 = vsyncadd [#allocation7], 0
      %s48 = sshll.u32 %s7, 4
      %s49 = int_to_ptr.hbm [resolvable:$true] %s48
      %s50 = sshll.u32 [#allocation6], 4
      %s51 = int_to_ptr.vmem [resolvable:$true] %s50
      %53 = dma.hbm_to_vmem [thread:$0]  %s49, 16, %s51, [#allocation7]
    $region33: #{transformer_encoder.5} parent=1 // pred_fallthru
      _
    // Predicated region
    $region34: #{transformer_encoder.5} parent=1 // pred_check
      _
    $region35: #{transformer_encoder.5} parent=1 // pred_check_branch
      %55 = sbr.rel (0) target = $region37
    $region36: #{transformer_encoder.5} parent=1 // pred_region
      _
    $region37: #{transformer_encoder.5} parent=1 // pred_fallthru
      _
    // Predicated region
    $region38: #{transformer_encoder.5} parent=1 // pred_check
      _
    $region39: #{transformer_encoder.5} parent=1 // pred_check_branch
      %57 = sbr.rel (0) target = $region41
    $region40: #{transformer_encoder.5} parent=1 // pred_region
      %59 = vsyncadd [#allocation7], 0
      %s61 = sshll.u32 %s9, 4
      %s62 = int_to_ptr.hbm [resolvable:$true] %s61
      %s63 = sshll.u32 [#allocation8], 4
      %s64 = int_to_ptr.vmem [resolvable:$true] %s63
      %66 = dma.hbm_to_vmem [thread:$0]  %s62, 16, %s64, [#allocation7]
    $region41: #{transformer_encoder.5} parent=1 // pred_fallthru
      _
    // Predicated region
    $region42: #{transformer_encoder.5} parent=1 // pred_check
      _
    $region43: #{transformer_encoder.5} parent=1 // pred_check_branch
      %68 = sbr.rel (0) target = $region45
    $region44: #{transformer_encoder.5} parent=1 // pred_region
      _
    $region45: #{transformer_encoder.5} parent=1 // pred_fallthru
      _
    // Predicated region
    $region46: #{transformer_encoder.5} parent=1 // pred_check
      _
    $region47: #{transformer_encoder.5} parent=1 // pred_check_branch
      %70 = sbr.rel (0) target = $region49
    $region48: #{transformer_encoder.5} parent=1 // pred_region
      %72 = vsyncadd [#allocation10], 0
      %s74 = sshll.u32 %s11, 4
      %s75 = int_to_ptr.hbm [resolvable:$true] %s74
      %s76 = sshll.u32 [#allocation9], 4
      %s77 = int_to_ptr.vmem [resolvable:$true] %s76
      %79 = dma.hbm_to_vmem [thread:$0]  %s75, 16, %s77, [#allocation10]
    $region49: #{transformer_encoder.5} parent=1 // pred_fallthru
      _
    // Predicated region
    $region50: #{transformer_encoder.5} parent=1 // pred_check
      _
    $region51: #{transformer_encoder.5} parent=1 // pred_check_branch
      %81 = sbr.rel (0) target = $region53
    $region52: #{transformer_encoder.5} parent=1 // pred_region
      %83 = dma.done [#allocation5], 16
    $region53: #{transformer_encoder.5} parent=1 // pred_fallthru
      _
    // Predicated region
    $region54: #{transformer_encoder.5} parent=1 // pred_check
      _
    $region55: #{transformer_encoder.5} parent=1 // pred_check_branch
      %85 = sbr.rel (0) target = $region57
    $region56: #{transformer_encoder.5} parent=1 // pred_region
      %87 = dma.done [#allocation7], 16
    $region57: #{transformer_encoder.5} parent=1 // pred_fallthru
      _
    // Predicated region
    $region58: #{transformer_encoder.5} parent=1 // pred_check
      _
    $region59: #{transformer_encoder.5} parent=1 // pred_check_branch
      %89 = sbr.rel (0) target = $region61
    $region60: #{transformer_encoder.5} parent=1 // pred_region
      %91 = dma.done [#allocation7], 16
    $region61: #{transformer_encoder.5} parent=1 // pred_fallthru
      _
    // Predicated region
    $region62: #{transformer_encoder.5} parent=1 // pred_check
      _
    $region63: #{transformer_encoder.5} parent=1 // pred_check_branch
      %93 = sbr.rel (0) target = $region65
    $region64: #{transformer_encoder.5} parent=1 // pred_region
      %95 = dma.done [#allocation10], 16
    $region65: #{transformer_encoder.5} parent=1 // pred_fallthru
      _
    %p97 = scmp.eq.s32.totalorder 0, 0
    // Predicated region
    $region66: #{transformer_encoder.5} parent=1 // pred_check
      %p98 = pneg %p97
    $region67: #{transformer_encoder.5} parent=1 // pred_check_branch
      %100 = sbr.rel (%p98) target = $region69
    $region68: #{transformer_encoder.5} parent=1 // pred_region
      %v101 = vld [vmem:[%s0] sm:$0xf]
      %v102 = vld [vmem:[%s0 + $0x4] sm:$0xf]
      %v103 = vld [vmem:[%s2] sm:$0xf]
      %v104 = vld [vmem:[%s2 + $0x4] sm:$0xf]
      %v105 = vld [vmem:[%s2 + $0x8] sm:$0xf]
      %v106 = vld [vmem:[%s2 + $0xc] sm:$0xf]
      %v107 = vld [vmem:[%s3] sm:$0x1]
      %v109 = vperm.slane %v107, 0
      %v113 = vunpack.c.l.b16 %v101
      %v114 = vunpack.c.l.b16 %v102
      %v115 = vpack.c.b16 %v114, %v113
      %v120 = vunpack.c.l.b16 %v103
      %v121 = vunpack.c.l.b16 %v104
      %v122 = vunpack.c.l.b16 %v105
      %v123 = vunpack.c.l.b16 %v106
      %v124 = vpack.c.b16 %v121, %v120
      %v125 = vpack.c.b16 %v123, %v122
      %vm128 = vcmask 261120
      %v130 = vsel %vm128, %v115, 0
      %132 = vmatpush.bf16.msra.mxu0 0
      %133 = vmatpush.bf16.msra.mxu0 0
      %134 = vmatpush.bf16.msra.mxu0 0
      %135 = vmatpush.bf16.msra.mxu0 0
      %136 = vmatpush.bf16.msra.mxu0 0
      %137 = vmatpush.bf16.msra.mxu0 0
      %138 = vmatpush.bf16.msra.mxu0 %v125
      %139 = vmatpush.bf16.msra.mxu0 %v124
      %140 = vmatmul.bf16.gmra.mxu0 %v130
      %v141 = vpop.f32.mrf.mxu0
      %v142 = vadd.f32 %v109, %v141
      %v143 = vpop.f32.mrf.mxu0
      %v144 = vadd.f32 %v109, %v143
      %145 = vdwg.mxu0
      %v146 = vld [vmem:[%s1] sm:$0xf]
      %v147 = vld [vmem:[%s1 + $0x4] sm:$0xf]
      %v148 = vunpack.c.l.bf16 %v146
      %v149 = vunpack.c.l.bf16 %v147
      %v150 = vadd.f32 %v148, %v142
      %v151 = vadd.f32 %v149, %v144
      %v152 = vld [vmem:[%s4] sm:$0x1]
      %v153 = vld [vmem:[#allocation4] sm:$0x1]
      %v154 = vsel %vm128, %v150, 0.0
      %155 = vadd.xlane.f32.xlu0 %v154
      %v156 = vpop.xlane.xlu0 %155
      %v157 = vsel %vm128, %v151, 0.0
      %158 = vadd.xlane.f32.xlu0 %v157
      %v159 = vpop.xlane.xlu0 %158
      %v160 = vrcp.pop 32.0
      %v161 = vmul.f32 32.0, %v160
      %v162 = vsub.f32 1.0, %v161
      %v163 = vmul.f32 %v160, %v162
      %v164 = vadd.f32 %v160, %v163
      %vm165 = vweird.f32 %v160
      %v166 = vsel %vm165, %v160, %v164
      %v167 = vmul.f32 %v156, %v166
      %v168 = vmul.f32 %v159, %v166
      %v169 = vsub.f32 %v150, %v167
      %v170 = vsub.f32 %v151, %v168
      %v171 = vmul.f32 %v169, %v169
      %v172 = vmul.f32 %v170, %v170
      %v173 = vsel %vm128, %v171, 0.0
      %174 = vadd.xlane.f32.xlu0 %v173
      %v175 = vpop.xlane.xlu0 %174
      %v176 = vsel %vm128, %v172, 0.0
      %177 = vadd.xlane.f32.xlu0 %v176
      %v178 = vpop.xlane.xlu0 %177
      %v179 = vmul.f32 %v175, %v166
      %v180 = vmul.f32 %v178, %v166
      %v181 = vadd.f32 %v179, 1e-05
      %v182 = vadd.f32 %v180, 1e-05
      %v183 = vrsqrt.pop %v181
      %v184 = vmul.f32 %v183, %v181
      %v185 = vmul.f32 %v184, %v183
      %v186 = vmul.f32 0.5, %v185
      %v187 = vsub.f32 1.5, %v186
      %v188 = vmul.f32 %v183, %v187
      %vm189 = vweird.f32 %v181
      %vm190 = vweird.f32 %v183
      %vm191 = vmor %vm189, %vm190
      %v192 = vsel %vm191, %v183, %v188
      %v193 = vrsqrt.pop %v182
      %v194 = vmul.f32 %v193, %v182
      %v195 = vmul.f32 %v194, %v193
      %v196 = vmul.f32 0.5, %v195
      %v197 = vsub.f32 1.5, %v196
      %v198 = vmul.f32 %v193, %v197
      %vm199 = vweird.f32 %v182
      %vm200 = vweird.f32 %v193
      %vm201 = vmor %vm199, %vm200
      %v202 = vsel %vm201, %v193, %v198
      %v203 = vmul.f32 %v169, %v192
      %v204 = vmul.f32 %v170, %v202
      %v206 = vperm.slane %v152, 0
      %v208 = vmul.f32 %v203, %v206
      %v209 = vmul.f32 %v204, %v206
      %v211 = vperm.slane %v153, 0
      %v213 = vadd.f32 %v208, %v211
      %v214 = vadd.f32 %v209, %v211
      %v215 = vpack.c.bf16 %v213, %v213
      %v216 = vpack.c.bf16 %v214, %v214
      %vm217 = vcmask 257024
      %218 = vst.msk [vmem:[#allocation2] sm:$0xf] %vm217, %v215
      %219 = vst.msk [vmem:[#allocation2 + $0x4] sm:$0xf] %vm217, %v216
      %220 = vst.msk [vmem:[#allocation3] sm:$0xff] %vm128, 0.0
      %221 = vst.msk [vmem:[#allocation3 + $0x8] sm:$0xff] %vm128, 0.0
    $region69: #{transformer_encoder.5} parent=1 // pred_fallthru
      _
    %v222 = vld [vmem:[#allocation2] sm:$0xf]
    %v223 = vld [vmem:[#allocation2 + $0x4] sm:$0xf]
    %v224 = vld [vmem:[%s6] sm:$0xf]
    %v225 = vld [vmem:[%s6 + $0x4] sm:$0xf]
    %v226 = vld [vmem:[%s6 + $0x8] sm:$0xf]
    %v227 = vld [vmem:[%s6 + $0xc] sm:$0xf]
    %v228 = vld [vmem:[#allocation6] sm:$0x1]
    %v230 = vperm.slane %v228, 0
    %v234 = vunpack.c.l.b16 %v222
    %v235 = vunpack.c.l.b16 %v223
    %v236 = vpack.c.b16 %v235, %v234
    %v241 = vunpack.c.l.b16 %v224
    %v242 = vunpack.c.l.b16 %v225
    %v243 = vunpack.c.l.b16 %v226
    %v244 = vunpack.c.l.b16 %v227
    %v245 = vpack.c.b16 %v242, %v241
    %v246 = vpack.c.b16 %v244, %v243
    %vm249 = vcmask 261120
    %v251 = vsel %vm249, %v236, 0
    %253 = vmatpush.bf16.msra.mxu0 0
    %254 = vmatpush.bf16.msra.mxu0 0
    %255 = vmatpush.bf16.msra.mxu0 0
    %256 = vmatpush.bf16.msra.mxu0 0
    %257 = vmatpush.bf16.msra.mxu0 0
    %258 = vmatpush.bf16.msra.mxu0 0
    %259 = vmatpush.bf16.msra.mxu0 %v246
    %260 = vmatpush.bf16.msra.mxu0 %v245
    %261 = vmatmul.bf16.gmra.mxu0 %v251
    %v262 = vpop.f32.mrf.mxu0
    %v263 = vadd.f32 %v230, %v262
    %v264 = vpop.f32.mrf.mxu0
    %v265 = vadd.f32 %v230, %v264
    %266 = vdwg.mxu0
    %v267 = vmax.f32 %v263, 0.0
    %v268 = vmax.f32 %v265, 0.0
    %v269 = vld [vmem:[#allocation3] sm:$0xff]
    %v270 = vld [vmem:[#allocation3 + $0x8] sm:$0xff]
    %v271 = vpack.c.bf16 %v268, %v267
    %v272 = vld [vmem:[%s8] sm:$0xf]
    %v273 = vld [vmem:[%s8 + $0x4] sm:$0xf]
    %v274 = vld [vmem:[%s8 + $0x8] sm:$0xf]
    %v275 = vld [vmem:[%s8 + $0xc] sm:$0xf]
    %v276 = vld [vmem:[%s8 + $0x10] sm:$0xf]
    %v277 = vld [vmem:[%s8 + $0x14] sm:$0xf]
    %v278 = vld [vmem:[%s8 + $0x18] sm:$0xf]
    %v279 = vld [vmem:[%s8 + $0x1c] sm:$0xf]
    %v288 = vunpack.c.l.b16 %v272
    %v289 = vunpack.c.l.b16 %v273
    %v290 = vunpack.c.l.b16 %v274
    %v291 = vunpack.c.l.b16 %v275
    %v292 = vunpack.c.l.b16 %v276
    %v293 = vunpack.c.l.b16 %v277
    %v294 = vunpack.c.l.b16 %v278
    %v295 = vunpack.c.l.b16 %v279
    %v296 = vpack.c.b16 %v289, %v288
    %v297 = vpack.c.b16 %v291, %v290
    %v298 = vpack.c.b16 %v293, %v292
    %v299 = vpack.c.b16 %v295, %v294
    %vm304 = vcmask 523264
    %v306 = vsel %vm304, %v271, 0
    %308 = vmatpush.bf16.msra.mxu0 0
    %309 = vmatpush.bf16.msra.mxu0 0
    %310 = vmatpush.bf16.msra.mxu0 0
    %311 = vmatpush.bf16.msra.mxu0 0
    %312 = vmatpush.bf16.msra.mxu0 %v299
    %313 = vmatpush.bf16.msra.mxu0 %v298
    %314 = vmatpush.bf16.msra.mxu0 %v297
    %315 = vmatpush.bf16.msra.mxu0 %v296
    %316 = vmatmul.bf16.gmra.mxu0 %v306
    %v317 = vpop.f32.mrf.mxu0
    %v318 = vadd.f32 0.0, %v317
    %v319 = vpop.f32.mrf.mxu0
    %v320 = vadd.f32 0.0, %v319
    %321 = vdwg.mxu0
    %v322 = vadd.f32 %v269, %v318
    %v323 = vadd.f32 %v270, %v320
    %324 = vst.msk [vmem:[#allocation3] sm:$0xff] %vm249, %v322
    %325 = vst.msk [vmem:[#allocation3 + $0x8] sm:$0xff] %vm249, %v323
    // Predicated region
    $region70: #{transformer_encoder.5} parent=1 // pred_check
      %p326 = pneg %p97
    $region71: #{transformer_encoder.5} parent=1 // pred_check_branch
      %328 = sbr.rel (%p326) target = $region73
    $region72: #{transformer_encoder.5} parent=1 // pred_region
      %v329 = vld [vmem:[#allocation2] sm:$0xf]
      %v330 = vld [vmem:[#allocation2 + $0x4] sm:$0xf]
      %v331 = vunpack.c.l.bf16 %v329
      %v332 = vunpack.c.l.bf16 %v330
      %v333 = vld [vmem:[#allocation3] sm:$0xff]
      %v334 = vld [vmem:[#allocation3 + $0x8] sm:$0xff]
      %v335 = vadd.f32 %v331, %v333
      %v336 = vadd.f32 %v332, %v334
      %v337 = vld [vmem:[#allocation8] sm:$0x1]
      %v339 = vperm.slane %v337, 0
      %v341 = vadd.f32 %v335, %v339
      %v342 = vadd.f32 %v336, %v339
      %v343 = vld [vmem:[%s10] sm:$0x1]
      %v344 = vld [vmem:[#allocation9] sm:$0x1]
      %v345 = vsel %vm249, %v341, 0.0
      %346 = vadd.xlane.f32.xlu0 %v345
      %v347 = vpop.xlane.xlu0 %346
      %v348 = vsel %vm249, %v342, 0.0
      %349 = vadd.xlane.f32.xlu0 %v348
      %v350 = vpop.xlane.xlu0 %349
      %v351 = vrcp.pop 32.0
      %v352 = vmul.f32 32.0, %v351
      %v353 = vsub.f32 1.0, %v352
      %v354 = vmul.f32 %v351, %v353
      %v355 = vadd.f32 %v351, %v354
      %vm356 = vweird.f32 %v351
      %v357 = vsel %vm356, %v351, %v355
      %v358 = vmul.f32 %v347, %v357
      %v359 = vmul.f32 %v350, %v357
      %v360 = vsub.f32 %v341, %v358
      %v361 = vsub.f32 %v342, %v359
      %v362 = vmul.f32 %v360, %v360
      %v363 = vmul.f32 %v361, %v361
      %v364 = vsel %vm249, %v362, 0.0
      %365 = vadd.xlane.f32.xlu0 %v364
      %v366 = vpop.xlane.xlu0 %365
      %v367 = vsel %vm249, %v363, 0.0
      %368 = vadd.xlane.f32.xlu0 %v367
      %v369 = vpop.xlane.xlu0 %368
      %v370 = vmul.f32 %v366, %v357
      %v371 = vmul.f32 %v369, %v357
      %v372 = vadd.f32 %v370, 1e-05
      %v373 = vadd.f32 %v371, 1e-05
      %v374 = vrsqrt.pop %v372
      %v375 = vmul.f32 %v374, %v372
      %v376 = vmul.f32 %v375, %v374
      %v377 = vmul.f32 0.5, %v376
      %v378 = vsub.f32 1.5, %v377
      %v379 = vmul.f32 %v374, %v378
      %vm380 = vweird.f32 %v372
      %vm381 = vweird.f32 %v374
      %vm382 = vmor %vm380, %vm381
      %v383 = vsel %vm382, %v374, %v379
      %v384 = vrsqrt.pop %v373
      %v385 = vmul.f32 %v384, %v373
      %v386 = vmul.f32 %v385, %v384
      %v387 = vmul.f32 0.5, %v386
      %v388 = vsub.f32 1.5, %v387
      %v389 = vmul.f32 %v384, %v388
      %vm390 = vweird.f32 %v373
      %vm391 = vweird.f32 %v384
      %vm392 = vmor %vm390, %vm391
      %v393 = vsel %vm392, %v384, %v389
      %v394 = vmul.f32 %v360, %v383
      %v395 = vmul.f32 %v361, %v393
      %v397 = vperm.slane %v343, 0
      %v399 = vmul.f32 %v394, %v397
      %v400 = vmul.f32 %v395, %v397
      %v402 = vperm.slane %v344, 0
      %v404 = vadd.f32 %v399, %v402
      %v405 = vadd.f32 %v400, %v402
      %v406 = vpack.c.bf16 %v404, %v404
      %v407 = vpack.c.bf16 %v405, %v405
      %vm408 = vcmask 257024
      %409 = vst.msk [vmem:[%s12] sm:$0xf] %vm408, %v406
      %410 = vst.msk [vmem:[%s12 + $0x4] sm:$0xf] %vm408, %v407
    $region73: #{transformer_encoder.5} parent=1 // pred_fallthru
      _
    // Predicated region
    $region74: #{transformer_encoder.5} parent=1 // pred_check
      _
    $region75: #{transformer_encoder.5} parent=1 // pred_check_branch
      %412 = sbr.rel (0) target = $region77
    $region76: #{transformer_encoder.5} parent=1 // pred_region
      _
    $region77: #{transformer_encoder.5} parent=1 // pred_fallthru
      _
    // Predicated region
    $region78: #{transformer_encoder.5} parent=1 // pred_check
      _
    $region79: #{transformer_encoder.5} parent=1 // pred_check_branch
      %414 = sbr.rel (0) target = $region81
    $region80: #{transformer_encoder.5} parent=1 // pred_region
      _
    $region81: #{transformer_encoder.5} parent=1 // pred_fallthru
      _
    %415 = vsyncpa [#allocation5], 1
    %416 = vsyncpa [#allocation7], 1
    %417 = vsyncpa [#allocation10], 1

</llo_original>
